<compile_context>
chip_gen: v6e
topology: v6e:2x2x1
jax: 0.10.0
libtpu: 0.0.40
codegen_flags: <defaults>
</compile_context>

<pallas_src>
import functools

import jax
import jax.numpy as jnp
import numpy as np
from jax.experimental import pallas as pl
from jax.experimental.pallas import tpu as pltpu

PSF_HEAD_TEMP = 0.5  # TODO(synk): constant not defined in model.py; assumed 0.5


def _round_up(n, m):
    return ((n + m - 1) // m) * m


def _make_border_masks(H, W):
    """(9, H*W) float32 masks, one per 3x3 tap, zeroing out-of-image samples."""
    HW = H * W
    lane = np.arange(HW)
    col = lane % W
    row = lane // W
    out = np.ones((9, HW), np.float32)
    k = 0
    for dy in (-1, 0, 1):
        for dx in (-1, 0, 1):
            m = np.ones(HW, dtype=bool)
            if dy == -1:
                m &= row >= 1
            if dy == 1:
                m &= row <= H - 2
            if dx == -1:
                m &= col >= 1
            if dx == 1:
                m &= col <= W - 2
            out[k] = m.astype(np.float32)
            k += 1
    return out


def psf_head_kernel(x_ref, m1_ref, m2_ref, w1_ref, b1_ref, w2_ref, b2_ref,
                    w3_ref, b3_ref, fw1_ref, fb1_ref, fw2_ref, fb2_ref,
                    psf_ref, conf_ref, *, H, W, BB):
    HW = H * W
    N = BB * HW
    Cinp = x_ref.shape[0]
    x = x_ref[...]                                        # (Cinp, N) f32

    def im2col(plane, mask):
        # plane: (C, N) — BB images of HW pixels each on the lane axis.
        # The 9 taps are lane rolls; `mask` (pre-broadcast per channel in the
        # wrapper) zeroes every tap that falls outside its own image, which
        # also kills any roll wrap across adjacent image planes.
        pieces = []
        for dy in (-1, 0, 1):
            for dx in (-1, 0, 1):
                d = dy * W + dx
                sh = plane if d == 0 else pltpu.roll(plane, shift=(-d) % N, axis=1)
                pieces.append(sh)
        return jnp.concatenate(pieces, axis=0) * mask     # (9*C, N)

    # conv1 (3x3, SAME) + ReLU: one MXU dot, bf16 operands, f32 accumulate.
    p1 = im2col(x, m1_ref[...]).astype(jnp.bfloat16)      # (9*Cinp, N)
    y1 = jnp.maximum(
        jnp.dot(w1_ref[...], p1, preferred_element_type=jnp.float32)
        + b1_ref[...], 0.0)                               # (C1p, N) f32

    # conv2 (3x3, SAME) + ReLU.
    p2 = im2col(y1, m2_ref[...]).astype(jnp.bfloat16)     # (9*C1p, N)
    y2 = jnp.maximum(
        jnp.dot(w2_ref[...], p2, preferred_element_type=jnp.float32)
        + b2_ref[...], 0.0)                               # (C2p, N) f32

    # conv3 (1x1): sublane reduce; 1/temperature is folded into w3/b3.
    logits = jnp.sum(y2 * w3_ref[...], axis=0, keepdims=True) + b3_ref[...]  # (1, N)

    # softmax per image: rows = batch within block, lanes = flattened spatial.
    lg = logits.reshape(BB, HW)
    mx = jnp.max(lg, axis=-1, keepdims=True)
    e = jnp.exp(lg - mx)
    s = jnp.sum(e, axis=-1, keepdims=True)
    psf_ref[0] = (e / s).astype(psf_ref.dtype)            # dense (BB, HW) store

    # confidence branch: global average pool + 2-layer MLP for all BB at once.
    xm = jnp.sum(x.reshape(Cinp, BB, HW), axis=-1) * (1.0 / float(HW))  # (Cinp, BB)
    h1 = jnp.maximum(
        jnp.dot(fw1_ref[...], xm, preferred_element_type=jnp.float32)
        + fb1_ref[...], 0.0)                              # (C1p, BB)
    conf = jnp.sum(h1 * fw2_ref[...], axis=0, keepdims=True) + fb2_ref[...]  # (1, BB)
    conf_ref[0] = conf.astype(conf_ref.dtype)


def init_params(key, in_channels):
    c1 = in_channels // 2
    c2 = in_channels // 4
    ks = jax.random.split(key, 10)
    s = 0.1
    w1 = s * jax.random.normal(ks[0], (3, 3, in_channels, c1), jnp.float32)
    b1 = s * jax.random.normal(ks[1], (1, c1), jnp.float32)
    w2 = s * jax.random.normal(ks[2], (3, 3, c1, c2), jnp.float32)
    b2 = s * jax.random.normal(ks[3], (1, c2), jnp.float32)
    w3 = s * jax.random.normal(ks[4], (c2, 1), jnp.float32)
    b3 = s * jax.random.normal(ks[5], (1, 1), jnp.float32)
    fw1 = s * jax.random.normal(ks[6], (in_channels, c1), jnp.float32)
    fb1 = s * jax.random.normal(ks[7], (1, c1), jnp.float32)
    fw2 = s * jax.random.normal(ks[8], (c1, 1), jnp.float32)
    fb2 = s * jax.random.normal(ks[9], (1, 1), jnp.float32)
    return (w1, b1, w2, b2, w3, b3, fw1, fb1, fw2, fb2)


def _pick_block_batch(B):
    # v7x has two TensorCores per chip -> keep exactly 2 "parallel" grid steps;
    # v5e/v6e are single-TC -> collapse to as few steps as possible
    # (per-step overhead ~0.35us dominates at these tiny shapes).
    try:
        kind = jax.devices()[0].device_kind.lower()
    except Exception:
        kind = ""
    min_steps = 2 if ("v7" in kind and B >= 2) else 1
    cap = 32   # keeps im2col / mask VMEM well inside the scoped limit
    best = 1
    for bb in range(1, B + 1):
        if B % bb == 0 and bb <= cap and B // bb >= min_steps:
            best = bb
    return best


def psf_head_forward(x_nchw, params, temperature=PSF_HEAD_TEMP):
    B, Cin, H, W = x_nchw.shape
    HW = H * W
    (w1, b1, w2, b2, w3, b3, fw1, fb1, fw2, fb2) = params
    C1 = w1.shape[3]
    C2 = w2.shape[3]
    Cinp = _round_up(Cin, 8)
    C1p = _round_up(C1, 8)
    C2p = _round_up(C2, 8)

    BB = _pick_block_batch(B)
    G = B // BB
    N = BB * HW

    # Glue: channel-major layout with batch folded into the lane/N dimension.
    x_cf = jnp.transpose(x_nchw.reshape(B, Cin, HW).astype(jnp.float32),
                         (1, 0, 2)).reshape(Cin, B * HW)
    x_cf = jnp.pad(x_cf, ((0, Cinp - Cin), (0, 0)))                 # (Cinp, B*HW)

    # One-off weight repack: fused-tap matrices (bf16 for the MXU), channels
    # padded to x8, 1/temperature folded into the 1x1 conv.
    inv_temp = (1.0 / temperature) if temperature > 1e-6 else 1.0
    w1p = jnp.pad(w1, ((0, 0), (0, 0), (0, Cinp - Cin), (0, 0)))
    w1_mat = jnp.pad(w1p.reshape(9 * Cinp, C1).T,
                     ((0, C1p - C1), (0, 0))).astype(jnp.bfloat16)   # (C1p, 9*Cinp)
    b1_col = jnp.pad(b1.reshape(C1, 1), ((0, C1p - C1), (0, 0)))
    w2p = jnp.pad(w2, ((0, 0), (0, 0), (0, C1p - C1), (0, 0)))
    w2_mat = jnp.pad(w2p.reshape(9 * C1p, C2).T,
                     ((0, C2p - C2), (0, 0))).astype(jnp.bfloat16)   # (C2p, 9*C1p)
    b2_col = jnp.pad(b2.reshape(C2, 1), ((0, C2p - C2), (0, 0)))
    w3_col = jnp.pad(w3.reshape(C2, 1), ((0, C2p - C2), (0, 0))) * inv_temp
    b3_m = b3.reshape(1, 1) * inv_temp
    fw1_t = jnp.pad(fw1.T, ((0, C1p - C1), (0, Cinp - Cin)))         # (C1p, Cinp)
    fb1_col = jnp.pad(fb1.reshape(C1, 1), ((0, C1p - C1), (0, 0)))
    fw2_col = jnp.pad(fw2.reshape(C1, 1), ((0, C1p - C1), (0, 0)))
    fb2_m = fb2.reshape(1, 1)

    # Per-tap border masks, tiled per image plane (BB planes in the lane dim)
    # and pre-broadcast per channel -> one same-shape VPU multiply per conv.
    base = _make_border_masks(H, W)                        # (9, HW)
    tiled = np.tile(base, (1, BB))                         # (9, N)
    masks1 = jnp.asarray(np.repeat(tiled, Cinp, axis=0))   # (9*Cinp, N)
    masks2 = jnp.asarray(np.repeat(tiled, C1p, axis=0))    # (9*C1p, N)

    kernel = functools.partial(psf_head_kernel, H=H, W=W, BB=BB)

    def full(a):
        zeros = (0,) * a.ndim
        return pl.BlockSpec(a.shape, lambda i, _z=zeros: _z)

    psf_blocks, conf_blocks = pl.pallas_call(
        kernel,
        out_shape=(jax.ShapeDtypeStruct((G, BB, HW), jnp.float32),
                   jax.ShapeDtypeStruct((G, 1, BB), jnp.float32)),
        grid_spec=pltpu.PrefetchScalarGridSpec(
            num_scalar_prefetch=0,
            grid=(G,),
            in_specs=[
                pl.BlockSpec((Cinp, N), lambda i: (0, i)),          # x block
                full(masks1), full(masks2),
                full(w1_mat), full(b1_col),
                full(w2_mat), full(b2_col),
                full(w3_col), full(b3_m),
                full(fw1_t), full(fb1_col), full(fw2_col), full(fb2_m),
            ],
            out_specs=[
                pl.BlockSpec((1, BB, HW), lambda i: (i, 0, 0)),     # dense psf tile
                pl.BlockSpec((1, 1, BB), lambda i: (i, 0, 0)),      # packed conf row
            ],
        ),
        compiler_params=pltpu.CompilerParams(
            dimension_semantics=("parallel",)),
    )(x_cf, masks1, masks2, w1_mat, b1_col, w2_mat, b2_col, w3_col, b3_m,
      fw1_t, fb1_col, fw2_col, fb2_m)

    psf_map = psf_blocks.reshape(B, 1, H, W)      # matches PyTorch (b, 1, h, w)
    confidence = conf_blocks.reshape(B, 1)        # matches PyTorch (b, 1)
    return psf_map, confidence


def psf_head_reference(x_nchw, params, temperature=PSF_HEAD_TEMP):
    """Pure-JAX reference mirroring the PyTorch module."""
    (w1, b1, w2, b2, w3, b3, fw1, fb1, fw2, fb2) = params
    x = jnp.transpose(x_nchw, (0, 2, 3, 1)).astype(jnp.float32)  # NHWC
    dn = ('NHWC', 'HWIO', 'NHWC')
    y = jax.lax.conv_general_dilated(x, w1, (1, 1), 'SAME',
                                     dimension_numbers=dn) + b1.reshape(1, 1, 1, -1)
    y = jax.nn.relu(y)
    y = jax.lax.conv_general_dilated(y, w2, (1, 1), 'SAME',
                                     dimension_numbers=dn) + b2.reshape(1, 1, 1, -1)
    y = jax.nn.relu(y)
    logits = jnp.einsum('bhwc,co->bhwo', y, w3) + b3.reshape(1, 1, 1, -1)
    B, H, W, _ = logits.shape
    lg = jnp.transpose(logits, (0, 3, 1, 2)).reshape(B, 1, H * W)
    if temperature > 1e-6:
        lg = lg / temperature
    psf = jax.nn.softmax(lg, axis=-1).reshape(B, 1, H, W)
    xm = jnp.mean(x, axis=(1, 2))                      # (B, Cin)
    h1 = jax.nn.relu(xm @ fw1 + fb1)
    confidence = h1 @ fw2 + fb2                        # (B, 1)
    return psf, confidence


if __name__ == "__main__":
    key = jax.random.PRNGKey(0)
    k_x, k_p = jax.random.split(key)

    B, Cin, H, W = 2, 8, 16, 16
    x = jax.random.normal(k_x, (B, Cin, H, W), jnp.float32)
    params = init_params(k_p, Cin)

    psf_map, confidence = psf_head_forward(x, params)
    psf_map, confidence = jax.block_until_ready((psf_map, confidence))

    psf_ref, conf_ref = psf_head_reference(x, params)
    # bf16 MXU operands (f32 accumulation) -> modest psf tolerance
    np.testing.assert_allclose(np.asarray(psf_map), np.asarray(psf_ref),
                               rtol=2e-2, atol=5e-4)
    np.testing.assert_allclose(np.asarray(confidence), np.asarray(conf_ref),
                               rtol=5e-3, atol=1e-5)
    # exact division in the softmax -> rows sum to 1 to f32 accuracy
    np.testing.assert_allclose(np.asarray(psf_map).reshape(B, -1).sum(-1),
                               np.ones((B,)), rtol=0, atol=1e-4)

    print("KERNEL_OK")
</pallas_src>

<mosaic_0001>
module attributes {stable_mosaic.version = 11 : i64} {
  func.func @psf_head_kernel(%arg0: i32, %arg1: memref<8x512xf32, #tpu.memory_space<vmem>>, %arg2: memref<72x512xf32, #tpu.memory_space<vmem>>, %arg3: memref<72x512xf32, #tpu.memory_space<vmem>>, %arg4: memref<8x72xbf16, #tpu.memory_space<vmem>>, %arg5: memref<8x1xf32, #tpu.memory_space<vmem>>, %arg6: memref<8x72xbf16, #tpu.memory_space<vmem>>, %arg7: memref<8x1xf32, #tpu.memory_space<vmem>>, %arg8: memref<8x1xf32, #tpu.memory_space<vmem>>, %arg9: memref<1x1xf32, #tpu.memory_space<vmem>>, %arg10: memref<8x8xf32, #tpu.memory_space<vmem>>, %arg11: memref<8x1xf32, #tpu.memory_space<vmem>>, %arg12: memref<8x1xf32, #tpu.memory_space<vmem>>, %arg13: memref<1x1xf32, #tpu.memory_space<vmem>>, %arg14: memref<1x2x256xf32, #tpu.memory_space<vmem>>, %arg15: memref<1x1x2xf32, #tpu.memory_space<vmem>>) attributes {dimension_semantics = [#tpu.dimension_semantics<parallel>], iteration_bounds = array<i64: 1>, scalar_prefetch = 0 : i64, scratch_operands = 0 : i64, tpu.core_type = #tpu.core_type<tc>, window_params = [{transform_indices = @transform_0, window_bounds = array<i64: 8, 512>}, {pipeline_mode = #tpu.pipeline_mode<synchronous>, transform_indices = @transform_1, window_bounds = array<i64: 72, 512>}, {pipeline_mode = #tpu.pipeline_mode<synchronous>, transform_indices = @transform_2, window_bounds = array<i64: 72, 512>}, {pipeline_mode = #tpu.pipeline_mode<synchronous>, transform_indices = @transform_3, window_bounds = array<i64: 8, 72>}, {pipeline_mode = #tpu.pipeline_mode<synchronous>, transform_indices = @transform_4, window_bounds = array<i64: 8, 1>}, {pipeline_mode = #tpu.pipeline_mode<synchronous>, transform_indices = @transform_5, window_bounds = array<i64: 8, 72>}, {pipeline_mode = #tpu.pipeline_mode<synchronous>, transform_indices = @transform_6, window_bounds = array<i64: 8, 1>}, {pipeline_mode = #tpu.pipeline_mode<synchronous>, transform_indices = @transform_7, window_bounds = array<i64: 8, 1>}, {pipeline_mode = #tpu.pipeline_mode<synchronous>, transform_indices = @transform_8, window_bounds = array<i64: 1, 1>}, {pipeline_mode = #tpu.pipeline_mode<synchronous>, transform_indices = @transform_9, window_bounds = array<i64: 8, 8>}, {pipeline_mode = #tpu.pipeline_mode<synchronous>, transform_indices = @transform_10, window_bounds = array<i64: 8, 1>}, {pipeline_mode = #tpu.pipeline_mode<synchronous>, transform_indices = @transform_11, window_bounds = array<i64: 8, 1>}, {pipeline_mode = #tpu.pipeline_mode<synchronous>, transform_indices = @transform_12, window_bounds = array<i64: 1, 1>}, {transform_indices = @transform_13, window_bounds = array<i64: 1, 2, 256>}, {transform_indices = @transform_14, window_bounds = array<i64: 1, 1, 2>}]} {
    %c0 = arith.constant 0 : index
    %c0_0 = arith.constant 0 : index
    %0 = vector.load %arg1[%c0, %c0_0] : memref<8x512xf32, #tpu.memory_space<vmem>>, vector<8x512xf32>
    %c0_1 = arith.constant 0 : index
    %c0_2 = arith.constant 0 : index
    %1 = vector.load %arg2[%c0_1, %c0_2] : memref<72x512xf32, #tpu.memory_space<vmem>>, vector<72x512xf32>
    %c17_i32 = arith.constant 17 : i32
    %2 = tpu.dynamic_rotate %0 by %c17_i32 dim 1 : vector<8x512xf32>, i32 -> vector<8x512xf32>
    %c16_i32 = arith.constant 16 : i32
    %3 = tpu.dynamic_rotate %0 by %c16_i32 dim 1 : vector<8x512xf32>, i32 -> vector<8x512xf32>
    %c15_i32 = arith.constant 15 : i32
    %4 = tpu.dynamic_rotate %0 by %c15_i32 dim 1 : vector<8x512xf32>, i32 -> vector<8x512xf32>
    %c1_i32 = arith.constant 1 : i32
    %5 = tpu.dynamic_rotate %0 by %c1_i32 dim 1 : vector<8x512xf32>, i32 -> vector<8x512xf32>
    %c511_i32 = arith.constant 511 : i32
    %6 = tpu.dynamic_rotate %0 by %c511_i32 dim 1 : vector<8x512xf32>, i32 -> vector<8x512xf32>
    %c497_i32 = arith.constant 497 : i32
    %7 = tpu.dynamic_rotate %0 by %c497_i32 dim 1 : vector<8x512xf32>, i32 -> vector<8x512xf32>
    %c496_i32 = arith.constant 496 : i32
    %8 = tpu.dynamic_rotate %0 by %c496_i32 dim 1 : vector<8x512xf32>, i32 -> vector<8x512xf32>
    %c495_i32 = arith.constant 495 : i32
    %9 = tpu.dynamic_rotate %0 by %c495_i32 dim 1 : vector<8x512xf32>, i32 -> vector<8x512xf32>
    %10 = tpu.concatenate %2, %3, %4, %5, %0, %6, %7, %8, %9 in 0 : vector<8x512xf32>, vector<8x512xf32>, vector<8x512xf32>, vector<8x512xf32>, vector<8x512xf32>, vector<8x512xf32>, vector<8x512xf32>, vector<8x512xf32>, vector<8x512xf32> -> vector<72x512xf32>
    %11 = arith.mulf %10, %1 : vector<72x512xf32>
    %12 = arith.truncf %11 : vector<72x512xf32> to vector<72x512xbf16>
    %c0_3 = arith.constant 0 : index
    %c0_4 = arith.constant 0 : index
    %13 = vector.load %arg4[%c0_3, %c0_4] : memref<8x72xbf16, #tpu.memory_space<vmem>>, vector<8x72xbf16>
    %cst = arith.constant dense<0.000000e+00> : vector<8x512xf32>
    %14 = tpu.matmul %13, %12, %cst {dimension_numbers = #tpu.dot_dimension_numbers<[1], [0], [0], [1], [0, 0, 1, 1], [], []>} : vector<8x72xbf16>, vector<72x512xbf16>, vector<8x512xf32> -> vector<8x512xf32>
    %c0_5 = arith.constant 0 : index
    %c0_6 = arith.constant 0 : index
    %15 = vector.load %arg5[%c0_5, %c0_6] : memref<8x1xf32, #tpu.memory_space<vmem>>, vector<8x1xf32>
    %16 = vector.broadcast %15 : vector<8x1xf32> to vector<8x512xf32>
    %17 = arith.addf %14, %16 : vector<8x512xf32>
    %cst_7 = arith.constant 0.000000e+00 : f32
    %18 = vector.broadcast %cst_7 : f32 to vector<8x512xf32>
    %19 = arith.maximumf %17, %18 : vector<8x512xf32>
    %c0_8 = arith.constant 0 : index
    %c0_9 = arith.constant 0 : index
    %20 = vector.load %arg3[%c0_8, %c0_9] : memref<72x512xf32, #tpu.memory_space<vmem>>, vector<72x512xf32>
    %c17_i32_10 = arith.constant 17 : i32
    %21 = tpu.dynamic_rotate %19 by %c17_i32_10 dim 1 : vector<8x512xf32>, i32 -> vector<8x512xf32>
    %c16_i32_11 = arith.constant 16 : i32
    %22 = tpu.dynamic_rotate %19 by %c16_i32_11 dim 1 : vector<8x512xf32>, i32 -> vector<8x512xf32>
    %c15_i32_12 = arith.constant 15 : i32
    %23 = tpu.dynamic_rotate %19 by %c15_i32_12 dim 1 : vector<8x512xf32>, i32 -> vector<8x512xf32>
    %c1_i32_13 = arith.constant 1 : i32
    %24 = tpu.dynamic_rotate %19 by %c1_i32_13 dim 1 : vector<8x512xf32>, i32 -> vector<8x512xf32>
    %c511_i32_14 = arith.constant 511 : i32
    %25 = tpu.dynamic_rotate %19 by %c511_i32_14 dim 1 : vector<8x512xf32>, i32 -> vector<8x512xf32>
    %c497_i32_15 = arith.constant 497 : i32
    %26 = tpu.dynamic_rotate %19 by %c497_i32_15 dim 1 : vector<8x512xf32>, i32 -> vector<8x512xf32>
    %c496_i32_16 = arith.constant 496 : i32
    %27 = tpu.dynamic_rotate %19 by %c496_i32_16 dim 1 : vector<8x512xf32>, i32 -> vector<8x512xf32>
    %c495_i32_17 = arith.constant 495 : i32
    %28 = tpu.dynamic_rotate %19 by %c495_i32_17 dim 1 : vector<8x512xf32>, i32 -> vector<8x512xf32>
    %29 = tpu.concatenate %21, %22, %23, %24, %19, %25, %26, %27, %28 in 0 : vector<8x512xf32>, vector<8x512xf32>, vector<8x512xf32>, vector<8x512xf32>, vector<8x512xf32>, vector<8x512xf32>, vector<8x512xf32>, vector<8x512xf32>, vector<8x512xf32> -> vector<72x512xf32>
    %30 = arith.mulf %29, %20 : vector<72x512xf32>
    %31 = arith.truncf %30 : vector<72x512xf32> to vector<72x512xbf16>
    %c0_18 = arith.constant 0 : index
    %c0_19 = arith.constant 0 : index
    %32 = vector.load %arg6[%c0_18, %c0_19] : memref<8x72xbf16, #tpu.memory_space<vmem>>, vector<8x72xbf16>
    %cst_20 = arith.constant dense<0.000000e+00> : vector<8x512xf32>
    %33 = tpu.matmul %32, %31, %cst_20 {dimension_numbers = #tpu.dot_dimension_numbers<[1], [0], [0], [1], [0, 0, 1, 1], [], []>} : vector<8x72xbf16>, vector<72x512xbf16>, vector<8x512xf32> -> vector<8x512xf32>
    %c0_21 = arith.constant 0 : index
    %c0_22 = arith.constant 0 : index
    %34 = vector.load %arg7[%c0_21, %c0_22] : memref<8x1xf32, #tpu.memory_space<vmem>>, vector<8x1xf32>
    %35 = vector.broadcast %34 : vector<8x1xf32> to vector<8x512xf32>
    %36 = arith.addf %33, %35 : vector<8x512xf32>
    %cst_23 = arith.constant 0.000000e+00 : f32
    %37 = vector.broadcast %cst_23 : f32 to vector<8x512xf32>
    %38 = arith.maximumf %36, %37 : vector<8x512xf32>
    %c0_24 = arith.constant 0 : index
    %c0_25 = arith.constant 0 : index
    %39 = vector.load %arg8[%c0_24, %c0_25] : memref<8x1xf32, #tpu.memory_space<vmem>>, vector<8x1xf32>
    %40 = vector.broadcast %39 : vector<8x1xf32> to vector<8x512xf32>
    %41 = arith.mulf %38, %40 : vector<8x512xf32>
    %cst_26 = arith.constant dense<0.000000e+00> : vector<512xf32>
    %42 = vector.multi_reduction <add>, %41, %cst_26 [0] : vector<8x512xf32> to vector<512xf32>
    %43 = vector.shape_cast %42 : vector<512xf32> to vector<1x512xf32>
    %c0_27 = arith.constant 0 : index
    %c0_28 = arith.constant 0 : index
    %44 = vector.load %arg9[%c0_27, %c0_28] : memref<1x1xf32, #tpu.memory_space<vmem>>, vector<1x1xf32>
    %45 = vector.broadcast %44 : vector<1x1xf32> to vector<1x512xf32>
    %46 = arith.addf %43, %45 : vector<1x512xf32>
    %47 = vector.shape_cast %46 : vector<1x512xf32> to vector<2x256xf32>
    %cst_29 = arith.constant dense<0xFF800000> : vector<2xf32>
    %48 = vector.multi_reduction <maximumf>, %47, %cst_29 [1] : vector<2x256xf32> to vector<2xf32>
    %49 = vector.shape_cast %48 : vector<2xf32> to vector<2x1xf32>
    %50 = vector.broadcast %49 : vector<2x1xf32> to vector<2x256xf32>
    %51 = arith.subf %47, %50 : vector<2x256xf32>
    %52 = math.exp %51 : vector<2x256xf32>
    %cst_30 = arith.constant dense<0.000000e+00> : vector<2xf32>
    %53 = vector.multi_reduction <add>, %52, %cst_30 [1] : vector<2x256xf32> to vector<2xf32>
    %54 = vector.shape_cast %53 : vector<2xf32> to vector<2x1xf32>
    %55 = vector.broadcast %54 : vector<2x1xf32> to vector<2x256xf32>
    %56 = arith.divf %52, %55 : vector<2x256xf32>
    %c0_31 = arith.constant 0 : index
    %c0_32 = arith.constant 0 : index
    %c0_33 = arith.constant 0 : index
    %57 = vector.load %arg14[%c0_31, %c0_32, %c0_33] : memref<1x2x256xf32, #tpu.memory_space<vmem>>, vector<1x2x256xf32>
    %58 = vector.shape_cast %57 : vector<1x2x256xf32> to vector<2x256xf32>
    %59 = vector.shape_cast %56 : vector<2x256xf32> to vector<1x2x256xf32>
    tpu.vector_store %arg14[%c0_31, %c0_32, %c0_33], %59 {strides = array<i32>} : memref<1x2x256xf32, #tpu.memory_space<vmem>>, vector<1x2x256xf32>,
    %60 = vector.shape_cast %0 : vector<8x512xf32> to vector<8x2x256xf32>
    %cst_34 = arith.constant dense<0.000000e+00> : vector<8x2xf32>
    %61 = vector.multi_reduction <add>, %60, %cst_34 [2] : vector<8x2x256xf32> to vector<8x2xf32>
    %cst_35 = arith.constant 3.906250e-03 : f32
    %62 = vector.broadcast %cst_35 : f32 to vector<8x2xf32>
    %63 = arith.mulf %61, %62 : vector<8x2xf32>
    %c0_36 = arith.constant 0 : index
    %c0_37 = arith.constant 0 : index
    %64 = vector.load %arg10[%c0_36, %c0_37] : memref<8x8xf32, #tpu.memory_space<vmem>>, vector<8x8xf32>
    %cst_38 = arith.constant dense<0.000000e+00> : vector<8x2xf32>
    %65 = tpu.matmul %64, %63, %cst_38 {dimension_numbers = #tpu.dot_dimension_numbers<[1], [0], [0], [1], [0, 0, 1, 1], [], []>} : vector<8x8xf32>, vector<8x2xf32>, vector<8x2xf32> -> vector<8x2xf32>
    %c0_39 = arith.constant 0 : index
    %c0_40 = arith.constant 0 : index
    %66 = vector.load %arg11[%c0_39, %c0_40] : memref<8x1xf32, #tpu.memory_space<vmem>>, vector<8x1xf32>
    %67 = vector.broadcast %66 : vector<8x1xf32> to vector<8x2xf32>
    %68 = arith.addf %65, %67 : vector<8x2xf32>
    %cst_41 = arith.constant 0.000000e+00 : f32
    %69 = vector.broadcast %cst_41 : f32 to vector<8x2xf32>
    %70 = arith.maximumf %68, %69 : vector<8x2xf32>
    %c0_42 = arith.constant 0 : index
    %c0_43 = arith.constant 0 : index
    %71 = vector.load %arg12[%c0_42, %c0_43] : memref<8x1xf32, #tpu.memory_space<vmem>>, vector<8x1xf32>
    %72 = vector.broadcast %71 : vector<8x1xf32> to vector<8x2xf32>
    %73 = arith.mulf %70, %72 : vector<8x2xf32>
    %cst_44 = arith.constant dense<0.000000e+00> : vector<2xf32>
    %74 = vector.multi_reduction <add>, %73, %cst_44 [0] : vector<8x2xf32> to vector<2xf32>
    %75 = vector.shape_cast %74 : vector<2xf32> to vector<1x2xf32>
    %c0_45 = arith.constant 0 : index
    %c0_46 = arith.constant 0 : index
    %76 = vector.load %arg13[%c0_45, %c0_46] : memref<1x1xf32, #tpu.memory_space<vmem>>, vector<1x1xf32>
    %77 = vector.broadcast %76 : vector<1x1xf32> to vector<1x2xf32>
    %78 = arith.addf %75, %77 : vector<1x2xf32>
    %c0_47 = arith.constant 0 : index
    %c0_48 = arith.constant 0 : index
    %c0_49 = arith.constant 0 : index
    %79 = vector.load %arg15[%c0_47, %c0_48, %c0_49] : memref<1x1x2xf32, #tpu.memory_space<vmem>>, vector<1x1x2xf32>
    %80 = vector.shape_cast %79 : vector<1x1x2xf32> to vector<1x2xf32>
    %81 = vector.shape_cast %78 : vector<1x2xf32> to vector<1x1x2xf32>
    tpu.vector_store %arg15[%c0_47, %c0_48, %c0_49], %81 {strides = array<i32>} : memref<1x1x2xf32, #tpu.memory_space<vmem>>, vector<1x1x2xf32>,
    return
  }
  func.func @transform_0(%arg0: i32) -> (i32, i32) {
    %c0_i32 = arith.constant 0 : i32
    %c0_i32_0 = arith.constant 0 : i32
    return %c0_i32, %arg0 : i32, i32
  }
  func.func @transform_1(%arg0: i32) -> (i32, i32) {
    %c0_i32 = arith.constant 0 : i32
    %c0_i32_0 = arith.constant 0 : i32
    %c0_i32_1 = arith.constant 0 : i32
    return %c0_i32, %c0_i32_0 : i32, i32
  }
  func.func @transform_2(%arg0: i32) -> (i32, i32) {
    %c0_i32 = arith.constant 0 : i32
    %c0_i32_0 = arith.constant 0 : i32
    %c0_i32_1 = arith.constant 0 : i32
    return %c0_i32, %c0_i32_0 : i32, i32
  }
  func.func @transform_3(%arg0: i32) -> (i32, i32) {
    %c0_i32 = arith.constant 0 : i32
    %c0_i32_0 = arith.constant 0 : i32
    %c0_i32_1 = arith.constant 0 : i32
    return %c0_i32, %c0_i32_0 : i32, i32
  }
  func.func @transform_4(%arg0: i32) -> (i32, i32) {
    %c0_i32 = arith.constant 0 : i32
    %c0_i32_0 = arith.constant 0 : i32
    %c0_i32_1 = arith.constant 0 : i32
    return %c0_i32, %c0_i32_0 : i32, i32
  }
  func.func @transform_5(%arg0: i32) -> (i32, i32) {
    %c0_i32 = arith.constant 0 : i32
    %c0_i32_0 = arith.constant 0 : i32
    %c0_i32_1 = arith.constant 0 : i32
    return %c0_i32, %c0_i32_0 : i32, i32
  }
  func.func @transform_6(%arg0: i32) -> (i32, i32) {
    %c0_i32 = arith.constant 0 : i32
    %c0_i32_0 = arith.constant 0 : i32
    %c0_i32_1 = arith.constant 0 : i32
    return %c0_i32, %c0_i32_0 : i32, i32
  }
  func.func @transform_7(%arg0: i32) -> (i32, i32) {
    %c0_i32 = arith.constant 0 : i32
    %c0_i32_0 = arith.constant 0 : i32
    %c0_i32_1 = arith.constant 0 : i32
    return %c0_i32, %c0_i32_0 : i32, i32
  }
  func.func @transform_8(%arg0: i32) -> (i32, i32) {
    %c0_i32 = arith.constant 0 : i32
    %c0_i32_0 = arith.constant 0 : i32
    %c0_i32_1 = arith.constant 0 : i32
    return %c0_i32, %c0_i32_0 : i32, i32
  }
  func.func @transform_9(%arg0: i32) -> (i32, i32) {
    %c0_i32 = arith.constant 0 : i32
    %c0_i32_0 = arith.constant 0 : i32
    %c0_i32_1 = arith.constant 0 : i32
    return %c0_i32, %c0_i32_0 : i32, i32
  }
  func.func @transform_10(%arg0: i32) -> (i32, i32) {
    %c0_i32 = arith.constant 0 : i32
    %c0_i32_0 = arith.constant 0 : i32
    %c0_i32_1 = arith.constant 0 : i32
    return %c0_i32, %c0_i32_0 : i32, i32
  }
  func.func @transform_11(%arg0: i32) -> (i32, i32) {
    %c0_i32 = arith.constant 0 : i32
    %c0_i32_0 = arith.constant 0 : i32
    %c0_i32_1 = arith.constant 0 : i32
    return %c0_i32, %c0_i32_0 : i32, i32
  }
  func.func @transform_12(%arg0: i32) -> (i32, i32) {
    %c0_i32 = arith.constant 0 : i32
    %c0_i32_0 = arith.constant 0 : i32
    %c0_i32_1 = arith.constant 0 : i32
    return %c0_i32, %c0_i32_0 : i32, i32
  }
  func.func @transform_13(%arg0: i32) -> (i32, i32, i32) {
    %c0_i32 = arith.constant 0 : i32
    %c0_i32_0 = arith.constant 0 : i32
    %c0_i32_1 = arith.constant 0 : i32
    return %arg0, %c0_i32, %c0_i32_0 : i32, i32, i32
  }
  func.func @transform_14(%arg0: i32) -> (i32, i32, i32) {
    %c0_i32 = arith.constant 0 : i32
    %c0_i32_0 = arith.constant 0 : i32
    %c0_i32_1 = arith.constant 0 : i32
    return %arg0, %c0_i32, %c0_i32_0 : i32, i32, i32
  }
}

</mosaic_0001>

<llo_original>
// kernel: tpu_custom_call.1
$region0: #{tpu_custom_call.1}
  #allocation0 [shape = 'u32[]', space=smem, size = 0x4, offset = 0x4, fixed_abs, tag = 'smem constant byte address 0x4 - core index']
  #allocation1 [shape = 'u32[144,128]{1,0:T(1,128)}', space=vmem, size = 0x12000, scoped, tag = 'internal scratch']
  #allocation2 [shape = 'f32[1,1]{1,0:T(1,128)S(1)}', space=vmem, size = 0x200, scoped, tag = 'scoped memory for tpu_custom_call.1']
  #allocation3 [shape = 'f32[1,1]{1,0:T(1,128)S(1)}', space=vmem, size = 0x200, scoped, tag = 'scoped memory for tpu_custom_call.1']
  %s0 = inlined_call_operand.vmem [shape: f32[8,512], index: 0, kind: input, shape index: {}]
  %s1 = inlined_call_operand.hbm [shape: f32[72,512], index: 1, kind: input, shape index: {}]
  %s2 = inlined_call_operand.hbm [shape: f32[72,512], index: 2, kind: input, shape index: {}]
  %s3 = inlined_call_operand.vmem [shape: bf16[8,72], index: 3, kind: input, shape index: {}]
  %s4 = inlined_call_operand.vmem [shape: f32[8,1], index: 4, kind: input, shape index: {}]
  %s5 = inlined_call_operand.vmem [shape: bf16[8,72], index: 5, kind: input, shape index: {}]
  %s6 = inlined_call_operand.vmem [shape: f32[8,1], index: 6, kind: input, shape index: {}]
  %s7 = inlined_call_operand.vmem [shape: f32[8,1], index: 7, kind: input, shape index: {}]
  %s8 = inlined_call_operand.<no memory space> [shape: f32[1,1], index: 8, kind: input, shape index: {}]
  %s9 = inlined_call_operand.vmem [shape: f32[8,8], index: 9, kind: input, shape index: {}]
  %s10 = inlined_call_operand.vmem [shape: f32[8,1], index: 10, kind: input, shape index: {}]
  %s11 = inlined_call_operand.vmem [shape: f32[8,1], index: 11, kind: input, shape index: {}]
  %s12 = inlined_call_operand.<no memory space> [shape: f32[1,1], index: 12, kind: input, shape index: {}]
  %s13 = inlined_call_operand.hbm [shape: f32[1,2,256], index: 13, kind: output, shape index: {0}]
  %s14 = inlined_call_operand.hbm [shape: f32[1,1,2], index: 14, kind: output, shape index: {1}]
  %15 = xla_tuple %s13, %s14
  %s16 = sld [smem:[#allocation0]]
  $region78: #{tpu_custom_call.1} parent=0
    _
  %s18 = ssub.s32 1, %s16
  %s19 = scalar_select 0, %s18, %s16
  %v20 = vstv %s8
  %21 = vst [vmem:[#allocation2] sm:$0x1] %v20
  %v22 = vstv %s12
  %23 = vst [vmem:[#allocation3] sm:$0x1] %v22
  $region1: #{tpu_custom_call.1} parent=0
    #allocation4 [shape = 'u8[147456]{0}', space=vmem, size = 0x24000, scoped, tag = 'input window, operand 1, single buffered']
    #allocation5 [shape = 's32[1]{0}', space=sflag, size = 0x4, scoped, tag = 'scoped memory for tpu_custom_call.1']
    #allocation6 [shape = 's32[1]{0}', space=sflag, size = 0x4, scoped, tag = 'scoped memory for tpu_custom_call.1']
    #allocation7 [shape = 'u8[147456]{0}', space=vmem, size = 0x24000, scoped, tag = 'input window, operand 2, single buffered']
    #allocation8 [shape = 's32[1]{0}', space=sflag, size = 0x4, scoped, tag = 'scoped memory for tpu_custom_call.1']
    #allocation9 [shape = 'u8[2048]{0}', space=vmem, size = 0x800, scoped, tag = 'output window, operand 0, single buffered']
    #allocation10 [shape = 'u8[512]{0}', space=vmem, size = 0x400, scoped, tag = 'output window, operand 1, single buffered']
    #allocation11 [shape = 's32[1]{0}', space=sflag, size = 0x4, scoped, tag = 'scoped memory for tpu_custom_call.1']
    %24 = vsyncpa [#allocation5], 0
    %25 = vsyncpa [#allocation8], 0
    %26 = vsyncpa [#allocation6], 0
    %27 = vsyncpa [#allocation11], 0
    // Predicated region
    $region2: #{tpu_custom_call.1} parent=1 // pred_check
      _
    $region3: #{tpu_custom_call.1} parent=1 // pred_check_branch
      %29 = sbr.rel (0) target = $region5
    $region4: #{tpu_custom_call.1} parent=1 // pred_region
      _
    $region5: #{tpu_custom_call.1} parent=1 // pred_fallthru
      _
    // Predicated region
    $region6: #{tpu_custom_call.1} parent=1 // pred_check
      _
    $region7: #{tpu_custom_call.1} parent=1 // pred_check_branch
      %31 = sbr.rel (0) target = $region9
    $region8: #{tpu_custom_call.1} parent=1 // pred_region
      %s33 = ssub.s32 4608, 4608
      %34 = vsyncadd [#allocation5], %s33
      %s35 = sshll.u32 [#allocation4], 4
      %s36 = int_to_ptr.vmem [resolvable:$true] %s35
      %41 = dma.hbm_to_vmem [thread:$0]  %s1, 4608, %s36, [#allocation5], 512, 512, 32
    $region9: #{tpu_custom_call.1} parent=1 // pred_fallthru
      _
    // Predicated region
    $region10: #{tpu_custom_call.1} parent=1 // pred_check
      _
    $region11: #{tpu_custom_call.1} parent=1 // pred_check_branch
      %43 = sbr.rel (0) target = $region13
    $region12: #{tpu_custom_call.1} parent=1 // pred_region
      %s45 = ssub.s32 4608, 4608
      %46 = vsyncadd [#allocation8], %s45
      %s47 = sshll.u32 [#allocation7], 4
      %s48 = int_to_ptr.vmem [resolvable:$true] %s47
      %53 = dma.hbm_to_vmem [thread:$0]  %s2, 4608, %s48, [#allocation8], 512, 512, 32
    $region13: #{tpu_custom_call.1} parent=1 // pred_fallthru
      _
    // Predicated region
    $region14: #{tpu_custom_call.1} parent=1 // pred_check
      _
    $region15: #{tpu_custom_call.1} parent=1 // pred_check_branch
      %55 = sbr.rel (0) target = $region17
    $region16: #{tpu_custom_call.1} parent=1 // pred_region
      _
    $region17: #{tpu_custom_call.1} parent=1 // pred_fallthru
      _
    // Predicated region
    $region18: #{tpu_custom_call.1} parent=1 // pred_check
      _
    $region19: #{tpu_custom_call.1} parent=1 // pred_check_branch
      %57 = sbr.rel (0) target = $region21
    $region20: #{tpu_custom_call.1} parent=1 // pred_region
      _
    $region21: #{tpu_custom_call.1} parent=1 // pred_fallthru
      _
    // Predicated region
    $region22: #{tpu_custom_call.1} parent=1 // pred_check
      _
    $region23: #{tpu_custom_call.1} parent=1 // pred_check_branch
      %59 = sbr.rel (0) target = $region25
    $region24: #{tpu_custom_call.1} parent=1 // pred_region
      _
    $region25: #{tpu_custom_call.1} parent=1 // pred_fallthru
      _
    // Predicated region
    $region26: #{tpu_custom_call.1} parent=1 // pred_check
      _
    $region27: #{tpu_custom_call.1} parent=1 // pred_check_branch
      %61 = sbr.rel (0) target = $region29
    $region28: #{tpu_custom_call.1} parent=1 // pred_region
      _
    $region29: #{tpu_custom_call.1} parent=1 // pred_fallthru
      _
    // Predicated region
    $region30: #{tpu_custom_call.1} parent=1 // pred_check
      _
    $region31: #{tpu_custom_call.1} parent=1 // pred_check_branch
      %63 = sbr.rel (0) target = $region33
    $region32: #{tpu_custom_call.1} parent=1 // pred_region
      _
    $region33: #{tpu_custom_call.1} parent=1 // pred_fallthru
      _
    // Predicated region
    $region34: #{tpu_custom_call.1} parent=1 // pred_check
      _
    $region35: #{tpu_custom_call.1} parent=1 // pred_check_branch
      %65 = sbr.rel (0) target = $region37
    $region36: #{tpu_custom_call.1} parent=1 // pred_region
      _
    $region37: #{tpu_custom_call.1} parent=1 // pred_fallthru
      _
    // Predicated region
    $region38: #{tpu_custom_call.1} parent=1 // pred_check
      _
    $region39: #{tpu_custom_call.1} parent=1 // pred_check_branch
      %67 = sbr.rel (0) target = $region41
    $region40: #{tpu_custom_call.1} parent=1 // pred_region
      _
    $region41: #{tpu_custom_call.1} parent=1 // pred_fallthru
      _
    // Predicated region
    $region42: #{tpu_custom_call.1} parent=1 // pred_check
      _
    $region43: #{tpu_custom_call.1} parent=1 // pred_check_branch
      %69 = sbr.rel (0) target = $region45
    $region44: #{tpu_custom_call.1} parent=1 // pred_region
      _
    $region45: #{tpu_custom_call.1} parent=1 // pred_fallthru
      _
    // Predicated region
    $region46: #{tpu_custom_call.1} parent=1 // pred_check
      _
    $region47: #{tpu_custom_call.1} parent=1 // pred_check_branch
      %71 = sbr.rel (0) target = $region49
    $region48: #{tpu_custom_call.1} parent=1 // pred_region
      _
    $region49: #{tpu_custom_call.1} parent=1 // pred_fallthru
      _
    // Predicated region
    $region50: #{tpu_custom_call.1} parent=1 // pred_check
      _
    $region51: #{tpu_custom_call.1} parent=1 // pred_check_branch
      %73 = sbr.rel (0) target = $region53
    $region52: #{tpu_custom_call.1} parent=1 // pred_region
      _
    $region53: #{tpu_custom_call.1} parent=1 // pred_fallthru
      _
    // Predicated region
    $region54: #{tpu_custom_call.1} parent=1 // pred_check
      _
    $region55: #{tpu_custom_call.1} parent=1 // pred_check_branch
      %75 = sbr.rel (0) target = $region57
    $region56: #{tpu_custom_call.1} parent=1 // pred_region
      %76 = dma.done [#allocation5], 4608
    $region57: #{tpu_custom_call.1} parent=1 // pred_fallthru
      _
    // Predicated region
    $region58: #{tpu_custom_call.1} parent=1 // pred_check
      _
    $region59: #{tpu_custom_call.1} parent=1 // pred_check_branch
      %78 = sbr.rel (0) target = $region61
    $region60: #{tpu_custom_call.1} parent=1 // pred_region
      %79 = dma.done [#allocation8], 4608
    $region61: #{tpu_custom_call.1} parent=1 // pred_fallthru
      _
    %v81 = vld [vmem:[%s0] sm:$0xff]
    %v82 = vld [vmem:[%s0 + $0x8] sm:$0xff]
    %v83 = vld [vmem:[%s0 + $0x10] sm:$0xff]
    %v84 = vld [vmem:[%s0 + $0x18] sm:$0xff]
    %v85 = vld [vmem:[#allocation4] sm:$0xff]
    %v86 = vld [vmem:[#allocation4 + $0x8] sm:$0xff]
    %v87 = vld [vmem:[#allocation4 + $0x10] sm:$0xff]
    %v88 = vld [vmem:[#allocation4 + $0x18] sm:$0xff]
    %v89 = vld [vmem:[#allocation4 + $0x20] sm:$0xff]
    %v90 = vld [vmem:[#allocation4 + $0x28] sm:$0xff]
    %v91 = vld [vmem:[#allocation4 + $0x30] sm:$0xff]
    %v92 = vld [vmem:[#allocation4 + $0x38] sm:$0xff]
    %v93 = vld [vmem:[#allocation4 + $0x40] sm:$0xff]
    %v94 = vld [vmem:[#allocation4 + $0x48] sm:$0xff]
    %v95 = vld [vmem:[#allocation4 + $0x50] sm:$0xff]
    %v96 = vld [vmem:[#allocation4 + $0x58] sm:$0xff]
    %v97 = vld [vmem:[#allocation4 + $0x60] sm:$0xff]
    %v98 = vld [vmem:[#allocation4 + $0x68] sm:$0xff]
    %v99 = vld [vmem:[#allocation4 + $0x70] sm:$0xff]
    %v100 = vld [vmem:[#allocation4 + $0x78] sm:$0xff]
    %v101 = vld [vmem:[#allocation4 + $0x80] sm:$0xff]
    %v102 = vld [vmem:[#allocation4 + $0x88] sm:$0xff]
    %v103 = vld [vmem:[#allocation4 + $0x90] sm:$0xff]
    %v104 = vld [vmem:[#allocation4 + $0x98] sm:$0xff]
    %v105 = vld [vmem:[#allocation4 + $0xa0] sm:$0xff]
    %v106 = vld [vmem:[#allocation4 + $0xa8] sm:$0xff]
    %v107 = vld [vmem:[#allocation4 + $0xb0] sm:$0xff]
    %v108 = vld [vmem:[#allocation4 + $0xb8] sm:$0xff]
    %v109 = vld [vmem:[#allocation4 + $0xc0] sm:$0xff]
    %v110 = vld [vmem:[#allocation4 + $0xc8] sm:$0xff]
    %v111 = vld [vmem:[#allocation4 + $0xd0] sm:$0xff]
    %v112 = vld [vmem:[#allocation4 + $0xd8] sm:$0xff]
    %v113 = vld [vmem:[#allocation4 + $0xe0] sm:$0xff]
    %v114 = vld [vmem:[#allocation4 + $0xe8] sm:$0xff]
    %v115 = vld [vmem:[#allocation4 + $0xf0] sm:$0xff]
    %v116 = vld [vmem:[#allocation4 + $0xf8] sm:$0xff]
    %v117 = vld [vmem:[#allocation4 + $0x100] sm:$0xff]
    %v118 = vld [vmem:[#allocation4 + $0x108] sm:$0xff]
    %v119 = vld [vmem:[#allocation4 + $0x110] sm:$0xff]
    %v120 = vld [vmem:[#allocation4 + $0x118] sm:$0xff]
    %121 = vrot.lane.b32.xlu0 %v81, 17
    %v122 = vpop.permute.xlu0 %121
    %123 = vrot.lane.b32.xlu0 %v82, 17
    %v124 = vpop.permute.xlu0 %123
    %125 = vrot.lane.b32.xlu0 %v83, 17
    %v126 = vpop.permute.xlu0 %125
    %127 = vrot.lane.b32.xlu0 %v84, 17
    %v128 = vpop.permute.xlu0 %127
    %v129 = vlaneseq
    %v130 = vand.u32 %v129, 127
    %vm131 = vcmp.lt.s32.totalorder %v130, 17
    %v132 = vsel %vm131, %v126, %v128
    %v133 = vsel %vm131, %v124, %v126
    %v134 = vsel %vm131, %v122, %v124
    %v135 = vsel %vm131, %v128, %v122
    %136 = vrot.lane.b32.xlu0 %v81, 16
    %v137 = vpop.permute.xlu0 %136
    %138 = vrot.lane.b32.xlu0 %v82, 16
    %v139 = vpop.permute.xlu0 %138
    %140 = vrot.lane.b32.xlu0 %v83, 16
    %v141 = vpop.permute.xlu0 %140
    %142 = vrot.lane.b32.xlu0 %v84, 16
    %v143 = vpop.permute.xlu0 %142
    %vm144 = vcmp.lt.s32.totalorder %v130, 16
    %v145 = vsel %vm144, %v141, %v143
    %v146 = vsel %vm144, %v139, %v141
    %v147 = vsel %vm144, %v137, %v139
    %v148 = vsel %vm144, %v143, %v137
    %149 = vrot.lane.b32.xlu0 %v81, 15
    %v150 = vpop.permute.xlu0 %149
    %151 = vrot.lane.b32.xlu0 %v82, 15
    %v152 = vpop.permute.xlu0 %151
    %153 = vrot.lane.b32.xlu0 %v83, 15
    %v154 = vpop.permute.xlu0 %153
    %155 = vrot.lane.b32.xlu0 %v84, 15
    %v156 = vpop.permute.xlu0 %155
    %vm157 = vcmp.lt.s32.totalorder %v130, 15
    %v158 = vsel %vm157, %v154, %v156
    %v159 = vsel %vm157, %v152, %v154
    %v160 = vsel %vm157, %v150, %v152
    %v161 = vsel %vm157, %v156, %v150
    %162 = vrot.lane.b32.xlu0 %v81, 1
    %v163 = vpop.permute.xlu0 %162
    %164 = vrot.lane.b32.xlu0 %v82, 1
    %v165 = vpop.permute.xlu0 %164
    %166 = vrot.lane.b32.xlu0 %v83, 1
    %v167 = vpop.permute.xlu0 %166
    %168 = vrot.lane.b32.xlu0 %v84, 1
    %v169 = vpop.permute.xlu0 %168
    %vm170 = vcmp.lt.s32.totalorder %v130, 1
    %v171 = vsel %vm170, %v167, %v169
    %v172 = vsel %vm170, %v165, %v167
    %v173 = vsel %vm170, %v163, %v165
    %v174 = vsel %vm170, %v169, %v163
    %175 = vrot.lane.b32.xlu0 %v81, 127
    %v176 = vpop.permute.xlu0 %175
    %177 = vrot.lane.b32.xlu0 %v82, 127
    %v178 = vpop.permute.xlu0 %177
    %179 = vrot.lane.b32.xlu0 %v83, 127
    %v180 = vpop.permute.xlu0 %179
    %181 = vrot.lane.b32.xlu0 %v84, 127
    %v182 = vpop.permute.xlu0 %181
    %vm183 = vcmp.lt.s32.totalorder %v130, 127
    %v184 = vsel %vm183, %v180, %v182
    %v185 = vsel %vm183, %v178, %v180
    %v186 = vsel %vm183, %v176, %v178
    %v187 = vsel %vm183, %v182, %v176
    %188 = vrot.lane.b32.xlu0 %v81, 113
    %v189 = vpop.permute.xlu0 %188
    %190 = vrot.lane.b32.xlu0 %v82, 113
    %v191 = vpop.permute.xlu0 %190
    %192 = vrot.lane.b32.xlu0 %v83, 113
    %v193 = vpop.permute.xlu0 %192
    %194 = vrot.lane.b32.xlu0 %v84, 113
    %v195 = vpop.permute.xlu0 %194
    %vm196 = vcmp.lt.s32.totalorder %v130, 113
    %v197 = vsel %vm196, %v193, %v195
    %v198 = vsel %vm196, %v191, %v193
    %v199 = vsel %vm196, %v189, %v191
    %v200 = vsel %vm196, %v195, %v189
    %201 = vrot.lane.b32.xlu0 %v81, 112
    %v202 = vpop.permute.xlu0 %201
    %203 = vrot.lane.b32.xlu0 %v82, 112
    %v204 = vpop.permute.xlu0 %203
    %205 = vrot.lane.b32.xlu0 %v83, 112
    %v206 = vpop.permute.xlu0 %205
    %207 = vrot.lane.b32.xlu0 %v84, 112
    %v208 = vpop.permute.xlu0 %207
    %vm209 = vcmp.lt.s32.totalorder %v130, 112
    %v210 = vsel %vm209, %v206, %v208
    %v211 = vsel %vm209, %v204, %v206
    %v212 = vsel %vm209, %v202, %v204
    %v213 = vsel %vm209, %v208, %v202
    %214 = vrot.lane.b32.xlu0 %v81, 111
    %v215 = vpop.permute.xlu0 %214
    %216 = vrot.lane.b32.xlu0 %v82, 111
    %v217 = vpop.permute.xlu0 %216
    %218 = vrot.lane.b32.xlu0 %v83, 111
    %v219 = vpop.permute.xlu0 %218
    %220 = vrot.lane.b32.xlu0 %v84, 111
    %v221 = vpop.permute.xlu0 %220
    %vm222 = vcmp.lt.s32.totalorder %v130, 111
    %v223 = vsel %vm222, %v219, %v221
    %v224 = vsel %vm222, %v217, %v219
    %v225 = vsel %vm222, %v215, %v217
    %v226 = vsel %vm222, %v221, %v215
    %v227 = vmul.f32 %v135, %v85
    %v228 = vmul.f32 %v134, %v86
    %v229 = vmul.f32 %v133, %v87
    %v230 = vmul.f32 %v132, %v88
    %v231 = vmul.f32 %v148, %v89
    %v232 = vmul.f32 %v147, %v90
    %v233 = vmul.f32 %v146, %v91
    %v234 = vmul.f32 %v145, %v92
    %v235 = vmul.f32 %v161, %v93
    %v236 = vmul.f32 %v160, %v94
    %v237 = vmul.f32 %v159, %v95
    %v238 = vmul.f32 %v158, %v96
    %v239 = vmul.f32 %v174, %v97
    %v240 = vmul.f32 %v173, %v98
    %v241 = vmul.f32 %v172, %v99
    %v242 = vmul.f32 %v171, %v100
    %v243 = vmul.f32 %v81, %v101
    %v244 = vmul.f32 %v82, %v102
    %v245 = vmul.f32 %v83, %v103
    %v246 = vmul.f32 %v84, %v104
    %v247 = vmul.f32 %v186, %v105
    %v248 = vmul.f32 %v185, %v106
    %v249 = vmul.f32 %v184, %v107
    %v250 = vmul.f32 %v187, %v108
    %v251 = vmul.f32 %v199, %v109
    %v252 = vmul.f32 %v198, %v110
    %v253 = vmul.f32 %v197, %v111
    %v254 = vmul.f32 %v200, %v112
    %v255 = vmul.f32 %v212, %v113
    %v256 = vmul.f32 %v211, %v114
    %v257 = vmul.f32 %v210, %v115
    %v258 = vmul.f32 %v213, %v116
    %v259 = vmul.f32 %v225, %v117
    %v260 = vmul.f32 %v224, %v118
    %v261 = vmul.f32 %v223, %v119
    %v262 = vmul.f32 %v226, %v120
    %v263 = vpack.c.bf16 %v231, %v227
    %v264 = vpack.c.bf16 %v232, %v228
    %v265 = vpack.c.bf16 %v233, %v229
    %v266 = vpack.c.bf16 %v234, %v230
    %v267 = vpack.c.bf16 %v239, %v235
    %v268 = vpack.c.bf16 %v240, %v236
    %v269 = vpack.c.bf16 %v241, %v237
    %v270 = vpack.c.bf16 %v242, %v238
    %v271 = vpack.c.bf16 %v247, %v243
    %v272 = vpack.c.bf16 %v248, %v244
    %v273 = vpack.c.bf16 %v249, %v245
    %v274 = vpack.c.bf16 %v250, %v246
    %v275 = vpack.c.bf16 %v255, %v251
    %v276 = vpack.c.bf16 %v256, %v252
    %v277 = vpack.c.bf16 %v257, %v253
    %v278 = vpack.c.bf16 %v258, %v254
    %v279 = vpack.c.bf16 %v259, %v259
    %v280 = vpack.c.bf16 %v260, %v260
    %v281 = vpack.c.bf16 %v261, %v261
    %v282 = vpack.c.bf16 %v262, %v262
    %v283 = vld [vmem:[%s3] sm:$0xf]
    %v284 = vld [vmem:[%s4] sm:$0xff]
    %286 = vset.pattern.permute.xlu0 0
    %287 = vperm.xlu0 %286, %v284
    %v288 = vpop.permute.xlu0 %287
    %vm290 = vcmask 588800
    %v292 = vsel %vm290, %v283, 0
    %vm294 = vcmask 1043456
    %v296 = vsel %vm294, %v279, 0
    %v299 = vsel %vm294, %v280, 0
    %v302 = vsel %vm294, %v281, 0
    %v305 = vsel %vm294, %v282, 0
    %307 = vmatprep.subr.bf16.mxu0 0
    %308 = vmatpush1.bf16.msra.mxu0 0
    %309 = vmatprep.subr.bf16.mxu0 0
    %310 = vmatpush1.bf16.msra.mxu0 0
    %311 = vmatprep.subr.bf16.mxu0 0
    %312 = vmatpush1.bf16.msra.mxu0 0
    %313 = vmatprep.subr.bf16.mxu0 %v299
    %314 = vmatpush1.bf16.msra.mxu0 %v296
    %315 = vmatprep.subr.bf16.mxu0 %v276
    %316 = vmatpush1.bf16.msra.mxu0 %v275
    %317 = vmatprep.subr.bf16.mxu0 %v272
    %318 = vmatpush1.bf16.msra.mxu0 %v271
    %319 = vmatprep.subr.bf16.mxu0 %v268
    %320 = vmatpush1.bf16.msra.mxu0 %v267
    %321 = vmatprep.subr.bf16.mxu0 %v264
    %322 = vmatpush1.bf16.msra.mxu0 %v263
    %323 = vmatprep.subr.bf16.mxu0 0
    %324 = vmatpush2.bf16.msra.mxu0 0
    %325 = vmatprep.subr.bf16.mxu0 0
    %326 = vmatpush2.bf16.msra.mxu0 0
    %327 = vmatprep.subr.bf16.mxu0 0
    %328 = vmatpush2.bf16.msra.mxu0 0
    %329 = vmatprep.subr.bf16.mxu0 0
    %330 = vmatpush2.bf16.msra.mxu0 0
    %331 = vmatprep.subr.bf16.mxu0 0
    %332 = vmatpush2.bf16.msra.mxu0 0
    %333 = vmatprep.subr.bf16.mxu0 0
    %334 = vmatpush2.bf16.msra.mxu0 0
    %335 = vmatprep.subr.bf16.mxu0 0
    %336 = vmatpush2.bf16.msra.mxu0 0
    %337 = vmatprep.subr.bf16.mxu0 0
    %338 = vmatpush2.bf16.msra.mxu0 0
    %339 = vmatprep.mubr.bf16.mxu0 0
    %340 = vmatmul.mubr.bf16.gmra.mxu0 %v292
    %v341 = vpop.f32.mrf.mxu0
    %v342 = vadd.f32 %v288, %v341
    %v343 = vpop.f32.mrf.mxu0
    %v344 = vadd.f32 %v288, %v343
    %v345 = vpop.f32.mrf.mxu0
    %v346 = vpop.f32.mrf.mxu0
    %347 = vdwg.mxu0
    %348 = vmatprep.subr.bf16.mxu0 0
    %349 = vmatpush1.bf16.msra.mxu0 0
    %350 = vmatprep.subr.bf16.mxu0 0
    %351 = vmatpush1.bf16.msra.mxu0 0
    %352 = vmatprep.subr.bf16.mxu0 0
    %353 = vmatpush1.bf16.msra.mxu0 0
    %354 = vmatprep.subr.bf16.mxu0 %v305
    %355 = vmatpush1.bf16.msra.mxu0 %v302
    %356 = vmatprep.subr.bf16.mxu0 %v278
    %357 = vmatpush1.bf16.msra.mxu0 %v277
    %358 = vmatprep.subr.bf16.mxu0 %v274
    %359 = vmatpush1.bf16.msra.mxu0 %v273
    %360 = vmatprep.subr.bf16.mxu0 %v270
    %361 = vmatpush1.bf16.msra.mxu0 %v269
    %362 = vmatprep.subr.bf16.mxu0 %v266
    %363 = vmatpush1.bf16.msra.mxu0 %v265
    %364 = vmatprep.subr.bf16.mxu0 0
    %365 = vmatpush2.bf16.msra.mxu0 0
    %366 = vmatprep.subr.bf16.mxu0 0
    %367 = vmatpush2.bf16.msra.mxu0 0
    %368 = vmatprep.subr.bf16.mxu0 0
    %369 = vmatpush2.bf16.msra.mxu0 0
    %370 = vmatprep.subr.bf16.mxu0 0
    %371 = vmatpush2.bf16.msra.mxu0 0
    %372 = vmatprep.subr.bf16.mxu0 0
    %373 = vmatpush2.bf16.msra.mxu0 0
    %374 = vmatprep.subr.bf16.mxu0 0
    %375 = vmatpush2.bf16.msra.mxu0 0
    %376 = vmatprep.subr.bf16.mxu0 0
    %377 = vmatpush2.bf16.msra.mxu0 0
    %378 = vmatprep.subr.bf16.mxu0 0
    %379 = vmatpush2.bf16.msra.mxu0 0
    %380 = vmatprep.mubr.bf16.mxu0 0
    %381 = vmatmul.mubr.bf16.gmra.mxu0 %v292
    %v382 = vpop.f32.mrf.mxu0
    %v383 = vadd.f32 %v288, %v382
    %v384 = vpop.f32.mrf.mxu0
    %v385 = vadd.f32 %v288, %v384
    %v386 = vpop.f32.mrf.mxu0
    %v387 = vpop.f32.mrf.mxu0
    %388 = vdwg.mxu0
    %v389 = vmax.f32 %v342, 0.0
    %v390 = vmax.f32 %v344, 0.0
    %v391 = vmax.f32 %v383, 0.0
    %v392 = vmax.f32 %v385, 0.0
    %v393 = vld [vmem:[#allocation7] sm:$0xff]
    %v394 = vld [vmem:[#allocation7 + $0x8] sm:$0xff]
    %v395 = vld [vmem:[#allocation7 + $0x10] sm:$0xff]
    %v396 = vld [vmem:[#allocation7 + $0x18] sm:$0xff]
    %v397 = vld [vmem:[#allocation7 + $0x20] sm:$0xff]
    %v398 = vld [vmem:[#allocation7 + $0x28] sm:$0xff]
    %v399 = vld [vmem:[#allocation7 + $0x30] sm:$0xff]
    %v400 = vld [vmem:[#allocation7 + $0x38] sm:$0xff]
    %v401 = vld [vmem:[#allocation7 + $0x40] sm:$0xff]
    %v402 = vld [vmem:[#allocation7 + $0x48] sm:$0xff]
    %v403 = vld [vmem:[#allocation7 + $0x50] sm:$0xff]
    %v404 = vld [vmem:[#allocation7 + $0x58] sm:$0xff]
    %v405 = vld [vmem:[#allocation7 + $0x60] sm:$0xff]
    %v406 = vld [vmem:[#allocation7 + $0x68] sm:$0xff]
    %v407 = vld [vmem:[#allocation7 + $0x70] sm:$0xff]
    %v408 = vld [vmem:[#allocation7 + $0x78] sm:$0xff]
    %v409 = vld [vmem:[#allocation7 + $0x80] sm:$0xff]
    %v410 = vld [vmem:[#allocation7 + $0x88] sm:$0xff]
    %v411 = vld [vmem:[#allocation7 + $0x90] sm:$0xff]
    %v412 = vld [vmem:[#allocation7 + $0x98] sm:$0xff]
    %v413 = vld [vmem:[#allocation7 + $0xa0] sm:$0xff]
    %v414 = vld [vmem:[#allocation7 + $0xa8] sm:$0xff]
    %v415 = vld [vmem:[#allocation7 + $0xb0] sm:$0xff]
    %v416 = vld [vmem:[#allocation7 + $0xb8] sm:$0xff]
    %v417 = vld [vmem:[#allocation7 + $0xc0] sm:$0xff]
    %v418 = vld [vmem:[#allocation7 + $0xc8] sm:$0xff]
    %v419 = vld [vmem:[#allocation7 + $0xd0] sm:$0xff]
    %v420 = vld [vmem:[#allocation7 + $0xd8] sm:$0xff]
    %v421 = vld [vmem:[#allocation7 + $0xe0] sm:$0xff]
    %v422 = vld [vmem:[#allocation7 + $0xe8] sm:$0xff]
    %v423 = vld [vmem:[#allocation7 + $0xf0] sm:$0xff]
    %v424 = vld [vmem:[#allocation7 + $0xf8] sm:$0xff]
    %v425 = vld [vmem:[#allocation7 + $0x100] sm:$0xff]
    %v426 = vld [vmem:[#allocation7 + $0x108] sm:$0xff]
    %v427 = vld [vmem:[#allocation7 + $0x110] sm:$0xff]
    %v428 = vld [vmem:[#allocation7 + $0x118] sm:$0xff]
    %429 = vrot.lane.b32.xlu0 %v389, 17
    %v430 = vpop.permute.xlu0 %429
    %431 = vrot.lane.b32.xlu0 %v390, 17
    %v432 = vpop.permute.xlu0 %431
    %433 = vrot.lane.b32.xlu0 %v391, 17
    %v434 = vpop.permute.xlu0 %433
    %435 = vrot.lane.b32.xlu0 %v392, 17
    %v436 = vpop.permute.xlu0 %435
    %v437 = vsel %vm131, %v434, %v436
    %v438 = vsel %vm131, %v432, %v434
    %v439 = vsel %vm131, %v430, %v432
    %v440 = vsel %vm131, %v436, %v430
    %441 = vrot.lane.b32.xlu0 %v389, 16
    %v442 = vpop.permute.xlu0 %441
    %443 = vrot.lane.b32.xlu0 %v390, 16
    %v444 = vpop.permute.xlu0 %443
    %445 = vrot.lane.b32.xlu0 %v391, 16
    %v446 = vpop.permute.xlu0 %445
    %447 = vrot.lane.b32.xlu0 %v392, 16
    %v448 = vpop.permute.xlu0 %447
    %v449 = vsel %vm144, %v446, %v448
    %v450 = vsel %vm144, %v444, %v446
    %v451 = vsel %vm144, %v442, %v444
    %v452 = vsel %vm144, %v448, %v442
    %453 = vrot.lane.b32.xlu0 %v389, 15
    %v454 = vpop.permute.xlu0 %453
    %455 = vrot.lane.b32.xlu0 %v390, 15
    %v456 = vpop.permute.xlu0 %455
    %457 = vrot.lane.b32.xlu0 %v391, 15
    %v458 = vpop.permute.xlu0 %457
    %459 = vrot.lane.b32.xlu0 %v392, 15
    %v460 = vpop.permute.xlu0 %459
    %v461 = vsel %vm157, %v458, %v460
    %v462 = vsel %vm157, %v456, %v458
    %v463 = vsel %vm157, %v454, %v456
    %v464 = vsel %vm157, %v460, %v454
    %465 = vrot.lane.b32.xlu0 %v389, 1
    %v466 = vpop.permute.xlu0 %465
    %467 = vrot.lane.b32.xlu0 %v390, 1
    %v468 = vpop.permute.xlu0 %467
    %469 = vrot.lane.b32.xlu0 %v391, 1
    %v470 = vpop.permute.xlu0 %469
    %471 = vrot.lane.b32.xlu0 %v392, 1
    %v472 = vpop.permute.xlu0 %471
    %v473 = vsel %vm170, %v470, %v472
    %v474 = vsel %vm170, %v468, %v470
    %v475 = vsel %vm170, %v466, %v468
    %v476 = vsel %vm170, %v472, %v466
    %477 = vrot.lane.b32.xlu0 %v389, 127
    %v478 = vpop.permute.xlu0 %477
    %479 = vrot.lane.b32.xlu0 %v390, 127
    %v480 = vpop.permute.xlu0 %479
    %481 = vrot.lane.b32.xlu0 %v391, 127
    %v482 = vpop.permute.xlu0 %481
    %483 = vrot.lane.b32.xlu0 %v392, 127
    %v484 = vpop.permute.xlu0 %483
    %v485 = vsel %vm183, %v482, %v484
    %v486 = vsel %vm183, %v480, %v482
    %v487 = vsel %vm183, %v478, %v480
    %v488 = vsel %vm183, %v484, %v478
    %489 = vrot.lane.b32.xlu0 %v389, 113
    %v490 = vpop.permute.xlu0 %489
    %491 = vrot.lane.b32.xlu0 %v390, 113
    %v492 = vpop.permute.xlu0 %491
    %493 = vrot.lane.b32.xlu0 %v391, 113
    %v494 = vpop.permute.xlu0 %493
    %495 = vrot.lane.b32.xlu0 %v392, 113
    %v496 = vpop.permute.xlu0 %495
    %v497 = vsel %vm196, %v494, %v496
    %v498 = vsel %vm196, %v492, %v494
    %v499 = vsel %vm196, %v490, %v492
    %v500 = vsel %vm196, %v496, %v490
    %501 = vrot.lane.b32.xlu0 %v389, 112
    %v502 = vpop.permute.xlu0 %501
    %503 = vrot.lane.b32.xlu0 %v390, 112
    %v504 = vpop.permute.xlu0 %503
    %505 = vrot.lane.b32.xlu0 %v391, 112
    %v506 = vpop.permute.xlu0 %505
    %507 = vrot.lane.b32.xlu0 %v392, 112
    %v508 = vpop.permute.xlu0 %507
    %v509 = vsel %vm209, %v506, %v508
    %v510 = vsel %vm209, %v504, %v506
    %v511 = vsel %vm209, %v502, %v504
    %v512 = vsel %vm209, %v508, %v502
    %513 = vrot.lane.b32.xlu0 %v389, 111
    %v514 = vpop.permute.xlu0 %513
    %515 = vrot.lane.b32.xlu0 %v390, 111
    %v516 = vpop.permute.xlu0 %515
    %517 = vrot.lane.b32.xlu0 %v391, 111
    %v518 = vpop.permute.xlu0 %517
    %519 = vrot.lane.b32.xlu0 %v392, 111
    %v520 = vpop.permute.xlu0 %519
    %v521 = vsel %vm222, %v518, %v520
    %v522 = vsel %vm222, %v516, %v518
    %v523 = vsel %vm222, %v514, %v516
    %v524 = vsel %vm222, %v520, %v514
    %v525 = vmul.f32 %v440, %v393
    %v526 = vmul.f32 %v439, %v394
    %v527 = vmul.f32 %v438, %v395
    %v528 = vmul.f32 %v437, %v396
    %v529 = vmul.f32 %v452, %v397
    %v530 = vmul.f32 %v451, %v398
    %v531 = vmul.f32 %v450, %v399
    %v532 = vmul.f32 %v449, %v400
    %v533 = vmul.f32 %v464, %v401
    %v534 = vmul.f32 %v463, %v402
    %v535 = vmul.f32 %v462, %v403
    %v536 = vmul.f32 %v461, %v404
    %v537 = vmul.f32 %v476, %v405
    %v538 = vmul.f32 %v475, %v406
    %v539 = vmul.f32 %v474, %v407
    %v540 = vmul.f32 %v473, %v408
    %v541 = vmul.f32 %v389, %v409
    %v542 = vmul.f32 %v390, %v410
    %v543 = vmul.f32 %v391, %v411
    %v544 = vmul.f32 %v392, %v412
    %v545 = vmul.f32 %v487, %v413
    %v546 = vmul.f32 %v486, %v414
    %v547 = vmul.f32 %v485, %v415
    %v548 = vmul.f32 %v488, %v416
    %v549 = vmul.f32 %v499, %v417
    %v550 = vmul.f32 %v498, %v418
    %v551 = vmul.f32 %v497, %v419
    %v552 = vmul.f32 %v500, %v420
    %v553 = vmul.f32 %v511, %v421
    %v554 = vmul.f32 %v510, %v422
    %v555 = vmul.f32 %v509, %v423
    %v556 = vmul.f32 %v512, %v424
    %v557 = vmul.f32 %v523, %v425
    %v558 = vmul.f32 %v522, %v426
    %v559 = vmul.f32 %v521, %v427
    %v560 = vmul.f32 %v524, %v428
    %v561 = vpack.c.bf16 %v529, %v525
    %v562 = vpack.c.bf16 %v530, %v526
    %v563 = vpack.c.bf16 %v531, %v527
    %v564 = vpack.c.bf16 %v532, %v528
    %v565 = vpack.c.bf16 %v537, %v533
    %v566 = vpack.c.bf16 %v538, %v534
    %v567 = vpack.c.bf16 %v539, %v535
    %v568 = vpack.c.bf16 %v540, %v536
    %v569 = vpack.c.bf16 %v545, %v541
    %v570 = vpack.c.bf16 %v546, %v542
    %v571 = vpack.c.bf16 %v547, %v543
    %v572 = vpack.c.bf16 %v548, %v544
    %v573 = vpack.c.bf16 %v553, %v549
    %v574 = vpack.c.bf16 %v554, %v550
    %v575 = vpack.c.bf16 %v555, %v551
    %v576 = vpack.c.bf16 %v556, %v552
    %v577 = vpack.c.bf16 %v557, %v557
    %v578 = vpack.c.bf16 %v558, %v558
    %v579 = vpack.c.bf16 %v559, %v559
    %v580 = vpack.c.bf16 %v560, %v560
    %v581 = vld [vmem:[%s5] sm:$0xf]
    %v582 = vld [vmem:[%s6] sm:$0xff]
    %584 = vset.pattern.permute.xlu0 0
    %585 = vperm.xlu0 %584, %v582
    %v586 = vpop.permute.xlu0 %585
    %v589 = vsel %vm290, %v581, 0
    %v592 = vsel %vm294, %v577, 0
    %v595 = vsel %vm294, %v578, 0
    %v598 = vsel %vm294, %v579, 0
    %v601 = vsel %vm294, %v580, 0
    %603 = vmatprep.subr.bf16.mxu0 0
    %604 = vmatpush1.bf16.msra.mxu0 0
    %605 = vmatprep.subr.bf16.mxu0 0
    %606 = vmatpush1.bf16.msra.mxu0 0
    %607 = vmatprep.subr.bf16.mxu0 0
    %608 = vmatpush1.bf16.msra.mxu0 0
    %609 = vmatprep.subr.bf16.mxu0 %v595
    %610 = vmatpush1.bf16.msra.mxu0 %v592
    %611 = vmatprep.subr.bf16.mxu0 %v574
    %612 = vmatpush1.bf16.msra.mxu0 %v573
    %613 = vmatprep.subr.bf16.mxu0 %v570
    %614 = vmatpush1.bf16.msra.mxu0 %v569
    %615 = vmatprep.subr.bf16.mxu0 %v566
    %616 = vmatpush1.bf16.msra.mxu0 %v565
    %617 = vmatprep.subr.bf16.mxu0 %v562
    %618 = vmatpush1.bf16.msra.mxu0 %v561
    %619 = vmatprep.subr.bf16.mxu0 0
    %620 = vmatpush2.bf16.msra.mxu0 0
    %621 = vmatprep.subr.bf16.mxu0 0
    %622 = vmatpush2.bf16.msra.mxu0 0
    %623 = vmatprep.subr.bf16.mxu0 0
    %624 = vmatpush2.bf16.msra.mxu0 0
    %625 = vmatprep.subr.bf16.mxu0 0
    %626 = vmatpush2.bf16.msra.mxu0 0
    %627 = vmatprep.subr.bf16.mxu0 0
    %628 = vmatpush2.bf16.msra.mxu0 0
    %629 = vmatprep.subr.bf16.mxu0 0
    %630 = vmatpush2.bf16.msra.mxu0 0
    %631 = vmatprep.subr.bf16.mxu0 0
    %632 = vmatpush2.bf16.msra.mxu0 0
    %633 = vmatprep.subr.bf16.mxu0 0
    %634 = vmatpush2.bf16.msra.mxu0 0
    %635 = vmatprep.mubr.bf16.mxu0 0
    %636 = vmatmul.mubr.bf16.gmra.mxu0 %v589
    %v637 = vpop.f32.mrf.mxu0
    %v638 = vadd.f32 %v586, %v637
    %v639 = vpop.f32.mrf.mxu0
    %v640 = vadd.f32 %v586, %v639
    %v641 = vpop.f32.mrf.mxu0
    %v642 = vpop.f32.mrf.mxu0
    %643 = vdwg.mxu0
    %644 = vmatprep.subr.bf16.mxu0 0
    %645 = vmatpush1.bf16.msra.mxu0 0
    %646 = vmatprep.subr.bf16.mxu0 0
    %647 = vmatpush1.bf16.msra.mxu0 0
    %648 = vmatprep.subr.bf16.mxu0 0
    %649 = vmatpush1.bf16.msra.mxu0 0
    %650 = vmatprep.subr.bf16.mxu0 %v601
    %651 = vmatpush1.bf16.msra.mxu0 %v598
    %652 = vmatprep.subr.bf16.mxu0 %v576
    %653 = vmatpush1.bf16.msra.mxu0 %v575
    %654 = vmatprep.subr.bf16.mxu0 %v572
    %655 = vmatpush1.bf16.msra.mxu0 %v571
    %656 = vmatprep.subr.bf16.mxu0 %v568
    %657 = vmatpush1.bf16.msra.mxu0 %v567
    %658 = vmatprep.subr.bf16.mxu0 %v564
    %659 = vmatpush1.bf16.msra.mxu0 %v563
    %660 = vmatprep.subr.bf16.mxu0 0
    %661 = vmatpush2.bf16.msra.mxu0 0
    %662 = vmatprep.subr.bf16.mxu0 0
    %663 = vmatpush2.bf16.msra.mxu0 0
    %664 = vmatprep.subr.bf16.mxu0 0
    %665 = vmatpush2.bf16.msra.mxu0 0
    %666 = vmatprep.subr.bf16.mxu0 0
    %667 = vmatpush2.bf16.msra.mxu0 0
    %668 = vmatprep.subr.bf16.mxu0 0
    %669 = vmatpush2.bf16.msra.mxu0 0
    %670 = vmatprep.subr.bf16.mxu0 0
    %671 = vmatpush2.bf16.msra.mxu0 0
    %672 = vmatprep.subr.bf16.mxu0 0
    %673 = vmatpush2.bf16.msra.mxu0 0
    %674 = vmatprep.subr.bf16.mxu0 0
    %675 = vmatpush2.bf16.msra.mxu0 0
    %676 = vmatprep.mubr.bf16.mxu0 0
    %677 = vmatmul.mubr.bf16.gmra.mxu0 %v589
    %v678 = vpop.f32.mrf.mxu0
    %v679 = vadd.f32 %v586, %v678
    %v680 = vpop.f32.mrf.mxu0
    %v681 = vadd.f32 %v586, %v680
    %v682 = vpop.f32.mrf.mxu0
    %v683 = vpop.f32.mrf.mxu0
    %684 = vdwg.mxu0
    %v685 = vmax.f32 %v638, 0.0
    %v686 = vmax.f32 %v640, 0.0
    %v687 = vmax.f32 %v679, 0.0
    %v688 = vmax.f32 %v681, 0.0
    %v689 = vld [vmem:[%s7] sm:$0xff]
    %691 = vset.pattern.permute.xlu0 0
    %692 = vperm.xlu0 %691, %v689
    %v693 = vpop.permute.xlu0 %692
    %v695 = vmul.f32 %v685, %v693
    %v696 = vmul.f32 %v686, %v693
    %v697 = vmul.f32 %v687, %v693
    %v698 = vmul.f32 %v688, %v693
    %v699 = vrot.slane %v695, 4
    %v700 = vadd.f32 %v695, %v699
    %v701 = vrot.slane %v700, 2
    %v702 = vadd.f32 %v700, %v701
    %v703 = vrot.slane %v702, 1
    %v704 = vadd.f32 %v702, %v703
    %v705 = vrot.slane %v696, 4
    %v706 = vadd.f32 %v696, %v705
    %v707 = vrot.slane %v706, 2
    %v708 = vadd.f32 %v706, %v707
    %v709 = vrot.slane %v708, 1
    %v710 = vadd.f32 %v708, %v709
    %v711 = vrot.slane %v697, 4
    %v712 = vadd.f32 %v697, %v711
    %v713 = vrot.slane %v712, 2
    %v714 = vadd.f32 %v712, %v713
    %v715 = vrot.slane %v714, 1
    %v716 = vadd.f32 %v714, %v715
    %v717 = vrot.slane %v698, 4
    %v718 = vadd.f32 %v698, %v717
    %v719 = vrot.slane %v718, 2
    %v720 = vadd.f32 %v718, %v719
    %v721 = vrot.slane %v720, 1
    %v722 = vadd.f32 %v720, %v721
    %v723 = vld [vmem:[#allocation2] sm:$0x1]
    %725 = vset.pattern.permute.xlu0 0
    %726 = vperm.xlu0 %725, %v723
    %v727 = vpop.permute.xlu0 %726
    %v729 = vlaneseq
    %v730 = vshrl.u32 %v729, 7
    %v731 = vsub.s32 0, %v730
    %v732 = vrot.slane %v727, %v731
    %v733 = vadd.f32 %v704, %v732
    %v734 = vadd.f32 %v710, %v732
    %v735 = vadd.f32 %v716, %v732
    %v736 = vadd.f32 %v722, %v732
    %v741 = vcombine.low %v733, %v734
    %v742 = vcombine.low %v735, %v736
    %v744 = vunpack.c.l.s4 1983009808
    %v745 = vunpack.c.0.s8 %v744
    %v746 = vlaneseq
    %v747 = vshrl.u32 %v746, 7
    %v748 = vsub.s32 %v745, %v747
    %v749 = vrot.slane %v741, %v748
    %v751 = vunpack.c.l.s4 1983009808
    %v752 = vunpack.c.0.s8 %v751
    %v753 = vlaneseq
    %v754 = vshrl.u32 %v753, 7
    %v755 = vsub.s32 %v752, %v754
    %v756 = vrot.slane %v742, %v755
    %v757 = vcombine.low %v749, %v756
    %v760 = vunpack.c.l.s4 1935823168
    %v761 = vunpack.c.0.s8 %v760
    %v762 = vlaneseq
    %v763 = vshrl.u32 %v762, 7
    %v764 = vsub.s32 %v761, %v763
    %v765 = vrot.slane %v757, %v764
    %v767 = vcombine.high %v765, %v765
    %vm769 = vcmask 1041408
    %v770 = vsel %vm769, %v765, -inf
    %v771 = vsel %vm769, %v767, -inf
    %v772 = vmax.f32 %v770, %v771
    %773 = vmax.xlane.f32.xlu0 %v772
    %v774 = vpop.xlane.xlu0 %773
    %v777 = vunpack.c.l.s4 839922192
    %v778 = vunpack.c.0.s8 %v777
    %v779 = vlaneseq
    %v780 = vshrl.u32 %v779, 7
    %v781 = vsub.s32 %v778, %v780
    %v782 = vrot.slane %v774, %v781
    %v784 = vsub.f32 %v765, %v782
    %v785 = vmul.f32 %v784, 1.442695
    %v786 = vpow.pop %v785
    %v788 = vcombine.high %v786, %v786
    %v790 = vsel %vm769, %v786, 0.0
    %v791 = vsel %vm769, %v788, 0.0
    %v792 = vadd.f32 %v790, %v791
    %793 = vadd.xlane.f32.xlu0 %v792
    %v794 = vpop.xlane.xlu0 %793
    %v797 = vunpack.c.l.s4 839922192
    %v798 = vunpack.c.0.s8 %v797
    %v799 = vlaneseq
    %v800 = vshrl.u32 %v799, 7
    %v801 = vsub.s32 %v798, %v800
    %v802 = vrot.slane %v794, %v801
    %v804 = vrcp.pop %v802
    %v805 = vmul.f32 %v786, %v804
    %v808 = vunpack.c.l.s4 1983009808
    %v809 = vunpack.c.0.s8 %v808
    %v810 = vlaneseq
    %v811 = vshrl.u32 %v810, 7
    %v812 = vsub.s32 %v809, %v811
    %v813 = vrot.slane %v805, %v812
    %815 = vst [vmem:[#allocation9] sm:$0xf] %v813
    %v816 = vld [vmem:[%s0] sm:$0xff]
    %v817 = vcombine.high %v81, 0.0
    %v819 = vunpack.c.l.s4 1983009808
    %v820 = vunpack.c.0.s8 %v819
    %v821 = vlaneseq
    %v822 = vshrl.u32 %v821, 7
    %v823 = vsub.s32 %v820, %v822
    %v824 = vrot.slane %v816, %v823
    %v826 = vunpack.c.l.s4 1983009808
    %v827 = vunpack.c.0.s8 %v826
    %v828 = vlaneseq
    %v829 = vshrl.u32 %v828, 7
    %v830 = vsub.s32 %v827, %v829
    %v831 = vrot.slane %v817, %v830
    %v832 = vld [vmem:[%s0 + $0x10] sm:$0xff]
    %v833 = vcombine.high %v83, 0.0
    %v835 = vunpack.c.l.s4 1983009808
    %v836 = vunpack.c.0.s8 %v835
    %v837 = vlaneseq
    %v838 = vshrl.u32 %v837, 7
    %v839 = vsub.s32 %v836, %v838
    %v840 = vrot.slane %v832, %v839
    %v842 = vunpack.c.l.s4 1983009808
    %v843 = vunpack.c.0.s8 %v842
    %v844 = vlaneseq
    %v845 = vshrl.u32 %v844, 7
    %v846 = vsub.s32 %v843, %v845
    %v847 = vrot.slane %v833, %v846
    %v848 = vcombine.low %v824, %v840
    %v849 = vcombine.high %v824, %v840
    %v851 = vunpack.c.l.s4 1934713408
    %v852 = vunpack.c.0.s8 %v851
    %v853 = vlaneseq
    %v854 = vshrl.u32 %v853, 7
    %v855 = vsub.s32 %v852, %v854
    %v856 = vrot.slane %v848, %v855
    %v858 = vunpack.c.l.s4 1934713408
    %v859 = vunpack.c.0.s8 %v858
    %v860 = vlaneseq
    %v861 = vshrl.u32 %v860, 7
    %v862 = vsub.s32 %v859, %v861
    %v863 = vrot.slane %v849, %v862
    %v864 = vcombine.low %v831, %v847
    %v865 = vcombine.high %v831, %v847
    %v867 = vunpack.c.l.s4 1934713408
    %v868 = vunpack.c.0.s8 %v867
    %v869 = vlaneseq
    %v870 = vshrl.u32 %v869, 7
    %v871 = vsub.s32 %v868, %v870
    %v872 = vrot.slane %v864, %v871
    %v874 = vunpack.c.l.s4 1934713408
    %v875 = vunpack.c.0.s8 %v874
    %v876 = vlaneseq
    %v877 = vshrl.u32 %v876, 7
    %v878 = vsub.s32 %v875, %v877
    %v879 = vrot.slane %v865, %v878
    %v880 = vcombine.high %v856, 0.0
    %v881 = vcombine.high %v863, 0.0
    %v882 = vcombine.high %v872, 0.0
    %v883 = vcombine.high %v879, 0.0
    %v884 = vld [vmem:[%s0 + $0x8] sm:$0xff]
    %v885 = vcombine.high %v82, 0.0
    %v887 = vunpack.c.l.s4 1983009808
    %v888 = vunpack.c.0.s8 %v887
    %v889 = vlaneseq
    %v890 = vshrl.u32 %v889, 7
    %v891 = vsub.s32 %v888, %v890
    %v892 = vrot.slane %v884, %v891
    %v894 = vunpack.c.l.s4 1983009808
    %v895 = vunpack.c.0.s8 %v894
    %v896 = vlaneseq
    %v897 = vshrl.u32 %v896, 7
    %v898 = vsub.s32 %v895, %v897
    %v899 = vrot.slane %v885, %v898
    %v900 = vld [vmem:[%s0 + $0x18] sm:$0xff]
    %v901 = vcombine.high %v84, 0.0
    %v903 = vunpack.c.l.s4 1983009808
    %v904 = vunpack.c.0.s8 %v903
    %v905 = vlaneseq
    %v906 = vshrl.u32 %v905, 7
    %v907 = vsub.s32 %v904, %v906
    %v908 = vrot.slane %v900, %v907
    %v910 = vunpack.c.l.s4 1983009808
    %v911 = vunpack.c.0.s8 %v910
    %v912 = vlaneseq
    %v913 = vshrl.u32 %v912, 7
    %v914 = vsub.s32 %v911, %v913
    %v915 = vrot.slane %v901, %v914
    %v916 = vcombine.low %v892, %v908
    %v917 = vcombine.high %v892, %v908
    %v919 = vunpack.c.l.s4 1934713408
    %v920 = vunpack.c.0.s8 %v919
    %v921 = vlaneseq
    %v922 = vshrl.u32 %v921, 7
    %v923 = vsub.s32 %v920, %v922
    %v924 = vrot.slane %v916, %v923
    %v926 = vunpack.c.l.s4 1934713408
    %v927 = vunpack.c.0.s8 %v926
    %v928 = vlaneseq
    %v929 = vshrl.u32 %v928, 7
    %v930 = vsub.s32 %v927, %v929
    %v931 = vrot.slane %v917, %v930
    %v932 = vcombine.low %v899, %v915
    %v933 = vcombine.high %v899, %v915
    %v935 = vunpack.c.l.s4 1934713408
    %v936 = vunpack.c.0.s8 %v935
    %v937 = vlaneseq
    %v938 = vshrl.u32 %v937, 7
    %v939 = vsub.s32 %v936, %v938
    %v940 = vrot.slane %v932, %v939
    %v942 = vunpack.c.l.s4 1934713408
    %v943 = vunpack.c.0.s8 %v942
    %v944 = vlaneseq
    %v945 = vshrl.u32 %v944, 7
    %v946 = vsub.s32 %v943, %v945
    %v947 = vrot.slane %v933, %v946
    %v948 = vcombine.high %v924, 0.0
    %v949 = vcombine.high %v931, 0.0
    %v950 = vcombine.high %v940, 0.0
    %v951 = vcombine.high %v947, 0.0
    %v952 = vsel %vm769, %v856, 0.0
    %v953 = vsel %vm769, %v924, 0.0
    %v954 = vadd.f32 %v952, %v953
    %955 = vadd.xlane.f32.xlu0 %v954
    %v956 = vpop.xlane.xlu0 %955
    %v957 = vsel %vm769, %v880, 0.0
    %v958 = vsel %vm769, %v948, 0.0
    %v959 = vadd.f32 %v957, %v958
    %960 = vadd.xlane.f32.xlu0 %v959
    %v961 = vpop.xlane.xlu0 %960
    %v962 = vsel %vm769, %v863, 0.0
    %v963 = vsel %vm769, %v931, 0.0
    %v964 = vadd.f32 %v962, %v963
    %965 = vadd.xlane.f32.xlu0 %v964
    %v966 = vpop.xlane.xlu0 %965
    %v967 = vsel %vm769, %v881, 0.0
    %v968 = vsel %vm769, %v949, 0.0
    %v969 = vadd.f32 %v967, %v968
    %970 = vadd.xlane.f32.xlu0 %v969
    %v971 = vpop.xlane.xlu0 %970
    %v972 = vsel %vm769, %v872, 0.0
    %v973 = vsel %vm769, %v940, 0.0
    %v974 = vadd.f32 %v972, %v973
    %975 = vadd.xlane.f32.xlu0 %v974
    %v976 = vpop.xlane.xlu0 %975
    %v977 = vsel %vm769, %v882, 0.0
    %v978 = vsel %vm769, %v950, 0.0
    %v979 = vadd.f32 %v977, %v978
    %980 = vadd.xlane.f32.xlu0 %v979
    %v981 = vpop.xlane.xlu0 %980
    %v982 = vsel %vm769, %v879, 0.0
    %v983 = vsel %vm769, %v947, 0.0
    %v984 = vadd.f32 %v982, %v983
    %985 = vadd.xlane.f32.xlu0 %v984
    %v986 = vpop.xlane.xlu0 %985
    %v987 = vsel %vm769, %v883, 0.0
    %v988 = vsel %vm769, %v951, 0.0
    %v989 = vadd.f32 %v987, %v988
    %990 = vadd.xlane.f32.xlu0 %v989
    %v991 = vpop.xlane.xlu0 %990
    %v992 = vmul.f32 %v956, 0.00390625
    %v993 = vmul.f32 %v961, 0.00390625
    %v994 = vmul.f32 %v966, 0.00390625
    %v995 = vmul.f32 %v971, 0.00390625
    %v996 = vmul.f32 %v976, 0.00390625
    %v997 = vmul.f32 %v981, 0.00390625
    %v998 = vmul.f32 %v986, 0.00390625
    %v999 = vmul.f32 %v991, 0.00390625
    %v1000 = vld [vmem:[%s9] sm:$0xff]
    %v1001 = vld [vmem:[%s10] sm:$0xff]
    %1003 = vset.pattern.permute.xlu0 0
    %1004 = vperm.xlu0 %1003, %v1001
    %v1005 = vpop.permute.xlu0 %1004
    %v1015 = vlaneseq
    %v1016 = vshrl.u32 %v1015, 7
    %v1017 = vsub.s32 %v130, %v1016
    %v1018 = vrot.slane %v992, %v1017
    %v1019 = vlaneseq
    %v1020 = vshrl.u32 %v1019, 7
    %v1021 = vsub.s32 %v130, %v1020
    %v1022 = vrot.slane %v993, %v1021
    %v1023 = vlaneseq
    %v1024 = vshrl.u32 %v1023, 7
    %v1025 = vsub.s32 %v130, %v1024
    %v1026 = vrot.slane %v994, %v1025
    %v1027 = vlaneseq
    %v1028 = vshrl.u32 %v1027, 7
    %v1029 = vsub.s32 %v130, %v1028
    %v1030 = vrot.slane %v995, %v1029
    %v1031 = vlaneseq
    %v1032 = vshrl.u32 %v1031, 7
    %v1033 = vsub.s32 %v130, %v1032
    %v1034 = vrot.slane %v996, %v1033
    %v1035 = vlaneseq
    %v1036 = vshrl.u32 %v1035, 7
    %v1037 = vsub.s32 %v130, %v1036
    %v1038 = vrot.slane %v997, %v1037
    %v1039 = vlaneseq
    %v1040 = vshrl.u32 %v1039, 7
    %v1041 = vsub.s32 %v130, %v1040
    %v1042 = vrot.slane %v998, %v1041
    %v1043 = vlaneseq
    %v1044 = vshrl.u32 %v1043, 7
    %v1045 = vsub.s32 %v130, %v1044
    %v1046 = vrot.slane %v999, %v1045
    %vm1047 = vcmask 1041409
    %v1048 = vsel %vm1047, %v1022, %v1018
    %vm1049 = vcmask 1042434
    %v1050 = vsel %vm1049, %v1026, %v1048
    %vm1051 = vcmask 1043459
    %v1052 = vsel %vm1051, %v1030, %v1050
    %vm1053 = vcmask 1044484
    %v1054 = vsel %vm1053, %v1034, %v1052
    %vm1055 = vcmask 1045509
    %v1056 = vsel %vm1055, %v1038, %v1054
    %vm1057 = vcmask 1046534
    %v1058 = vsel %vm1057, %v1042, %v1056
    %vm1059 = vcmask 1047559
    %v1060 = vsel %vm1059, %v1046, %v1058
    %vm1062 = vcmask 64512
    %v1064 = vsel %vm1062, %v1000, 0
    %1066 = vmatprep.subr.mxu0 0.0
    %1067 = vmatpush1.msra.mxu0 0.0
    %1068 = vmatprep.subr.mxu0 0.0
    %1069 = vmatpush1.msra.mxu0 0.0
    %1070 = vmatprep.subr.mxu0 0.0
    %1071 = vmatpush1.msra.mxu0 0.0
    %1072 = vmatprep.subr.mxu0 0.0
    %1073 = vmatpush1.msra.mxu0 0.0
    %1074 = vmatprep.subr.mxu0 0.0
    %1075 = vmatpush1.msra.mxu0 0.0
    %1076 = vmatprep.subr.mxu0 0.0
    %1077 = vmatpush1.msra.mxu0 0.0
    %1078 = vmatprep.subr.mxu0 0.0
    %1079 = vmatpush1.msra.mxu0 0.0
    %1080 = vmatprep.subr.mxu0 0.0
    %1081 = vmatpush1.msra.mxu0 0.0
    %1082 = vmatprep.subr.mxu0 0.0
    %1083 = vmatpush1.msra.mxu0 0.0
    %1084 = vmatprep.subr.mxu0 0.0
    %1085 = vmatpush1.msra.mxu0 0.0
    %1086 = vmatprep.subr.mxu0 0.0
    %1087 = vmatpush1.msra.mxu0 0.0
    %1088 = vmatprep.subr.mxu0 0.0
    %1089 = vmatpush1.msra.mxu0 0.0
    %1090 = vmatprep.subr.mxu0 0.0
    %1091 = vmatpush1.msra.mxu0 0.0
    %1092 = vmatprep.subr.mxu0 0.0
    %1093 = vmatpush1.msra.mxu0 0.0
    %1094 = vmatprep.subr.mxu0 0.0
    %1095 = vmatpush1.msra.mxu0 0.0
    %1096 = vmatprep.subr.mxu0 0.0
    %1097 = vmatpush1.msra.mxu0 %v1060
    %1098 = vmatprep.subr.mxu0 0.0
    %1099 = vmatpush2.msra.mxu0 0.0
    %1100 = vmatprep.subr.mxu0 0.0
    %1101 = vmatpush2.msra.mxu0 0.0
    %1102 = vmatprep.subr.mxu0 0.0
    %1103 = vmatpush2.msra.mxu0 0.0
    %1104 = vmatprep.subr.mxu0 0.0
    %1105 = vmatpush2.msra.mxu0 0.0
    %1106 = vmatprep.subr.mxu0 0.0
    %1107 = vmatpush2.msra.mxu0 0.0
    %1108 = vmatprep.subr.mxu0 0.0
    %1109 = vmatpush2.msra.mxu0 0.0
    %1110 = vmatprep.subr.mxu0 0.0
    %1111 = vmatpush2.msra.mxu0 0.0
    %1112 = vmatprep.subr.mxu0 0.0
    %1113 = vmatpush2.msra.mxu0 0.0
    %1114 = vmatprep.subr.mxu0 0.0
    %1115 = vmatpush2.msra.mxu0 0.0
    %1116 = vmatprep.subr.mxu0 0.0
    %1117 = vmatpush2.msra.mxu0 0.0
    %1118 = vmatprep.subr.mxu0 0.0
    %1119 = vmatpush2.msra.mxu0 0.0
    %1120 = vmatprep.subr.mxu0 0.0
    %1121 = vmatpush2.msra.mxu0 0.0
    %1122 = vmatprep.subr.mxu0 0.0
    %1123 = vmatpush2.msra.mxu0 0.0
    %1124 = vmatprep.subr.mxu0 0.0
    %1125 = vmatpush2.msra.mxu0 0.0
    %1126 = vmatprep.subr.mxu0 0.0
    %1127 = vmatpush2.msra.mxu0 0.0
    %1128 = vmatprep.subr.mxu0 0.0
    %1129 = vmatpush2.msra.mxu0 0.0
    %1130 = vmatprep.mubr.f32.mxu0 0.0
    %1131 = vmatmul.mubr.f32.gmra.mxu0 %v1064
    %v1132 = vpop.f32.mrf.mxu0
    %v1133 = vadd.f32 %v1005, %v1132
    %v1134 = vpop.f32.mrf.mxu0
    %1135 = vdwg.mxu0
    %v1136 = vmax.f32 %v1133, 0.0
    %v1137 = vld [vmem:[%s11] sm:$0xff]
    %1139 = vset.pattern.permute.xlu0 0
    %1140 = vperm.xlu0 %1139, %v1137
    %v1141 = vpop.permute.xlu0 %1140
    %v1143 = vmul.f32 %v1136, %v1141
    %vm1144 = vcmask 15360
    %v1145 = vsel %vm1144, %v1143, 0.0
    %v1146 = vrot.slane %v1145, 4
    %v1147 = vadd.f32 %v1145, %v1146
    %v1148 = vrot.slane %v1147, 2
    %v1149 = vadd.f32 %v1147, %v1148
    %v1150 = vrot.slane %v1149, 1
    %v1151 = vadd.f32 %v1149, %v1150
    %v1152 = vld [vmem:[#allocation3] sm:$0x1]
    %1154 = vset.pattern.permute.xlu0 0
    %1155 = vperm.xlu0 %1154, %v1152
    %v1156 = vpop.permute.xlu0 %1155
    %v1158 = vlaneseq
    %v1159 = vshrl.u32 %v1158, 7
    %v1160 = vsub.s32 0, %v1159
    %v1161 = vrot.slane %v1156, %v1160
    %v1162 = vadd.f32 %v1151, %v1161
    %vm1163 = vcmask 8192
    %1164 = vst.msk [vmem:[#allocation10] sm:$0x1] %vm1163, %v1162
    // Predicated region
    $region62: #{tpu_custom_call.1} parent=1 // pred_check
      _
    $region63: #{tpu_custom_call.1} parent=1 // pred_check_branch
      %1166 = sbr.rel (0) target = $region65
    $region64: #{tpu_custom_call.1} parent=1 // pred_region
      %s1168 = ssub.s32 64, 64
      %1169 = vsyncadd [#allocation6], %s1168
      %s1171 = sshll.u32 [#allocation9], 4
      %s1172 = int_to_ptr.vmem [resolvable:$true] %s1171
      %1174 = dma.vmem_to_hbm [thread:$0]  %s1172, 64, %s13, [#allocation6]
    $region65: #{tpu_custom_call.1} parent=1 // pred_fallthru
      _
    // Predicated region
    $region66: #{tpu_custom_call.1} parent=1 // pred_check
      _
    $region67: #{tpu_custom_call.1} parent=1 // pred_check_branch
      %1176 = sbr.rel (0) target = $region69
    $region68: #{tpu_custom_call.1} parent=1 // pred_region
      %s1178 = ssub.s32 16, 16
      %1179 = vsyncadd [#allocation11], %s1178
      %s1181 = sshll.u32 [#allocation10], 4
      %s1182 = int_to_ptr.vmem [resolvable:$true] %s1181
      %1184 = dma.vmem_to_hbm [thread:$0]  %s1182, 16, %s14, [#allocation11]
    $region69: #{tpu_custom_call.1} parent=1 // pred_fallthru
      _
    // Predicated region
    $region70: #{tpu_custom_call.1} parent=1 // pred_check
      _
    $region71: #{tpu_custom_call.1} parent=1 // pred_check_branch
      %1186 = sbr.rel (0) target = $region73
    $region72: #{tpu_custom_call.1} parent=1 // pred_region
      %1187 = dma.done [#allocation6], 64
    $region73: #{tpu_custom_call.1} parent=1 // pred_fallthru
      _
    // Predicated region
    $region74: #{tpu_custom_call.1} parent=1 // pred_check
      _
    $region75: #{tpu_custom_call.1} parent=1 // pred_check_branch
      %1189 = sbr.rel (0) target = $region77
    $region76: #{tpu_custom_call.1} parent=1 // pred_region
      %1190 = dma.done [#allocation11], 16
    $region77: #{tpu_custom_call.1} parent=1 // pred_fallthru
      _
    %1191 = vsyncpa [#allocation5], 1
    %1192 = vsyncpa [#allocation8], 1
    %1193 = vsyncpa [#allocation6], 1
    %1194 = vsyncpa [#allocation11], 1

</llo_original>
